<compile_context>
chip_gen: v5e
topology: v5e:2x2
jax: 0.10.0
libtpu: 0.0.40
codegen_flags: <defaults>
</compile_context>

<pallas_src>
import numpy as np
import jax
import jax.numpy as jnp
from jax.experimental import pallas as pl
from jax.experimental.pallas import tpu as pltpu

# ---------------- network configuration (from create_network) ----------------
LAYER_DIMS = [3] + [20] * 9 + [2]      # 10 Linear layers
NUM_LAYERS = len(LAYER_DIMS) - 1       # 10
NUM_HID = NUM_LAYERS - 2               # 8 hidden 20x20 layers
IN_F, HID, OUT_F = 3, 20, 2
MAX_TILE_ROWS = 1024                   # up to 1024 packed rows per grid step


def _select_config():
    """Pick lane width / activation dtype for the local TPU generation.

    v6e and v7x have a 2x256x256 bf16 MXU and bf16-native VPU/EUP -> 256-lane
    packing + bf16 activation carry.  v5e (and older) have 128x128 MXUs and no
    bf16 elementwise path -> keep the 128-lane / f32 configuration.
    """
    try:
        kind = jax.devices()[0].device_kind.lower()
    except Exception:
        kind = ""
    if any(tag in kind for tag in ("v6", "v7", "7x")):
        return 256, jnp.bfloat16
    return 128, jnp.float32


PAD, ACT_DTYPE = _select_config()      # hidden lane width, inter-layer act dtype
PACK = PAD // HID                      # points packed per row (6 or 12)
X_W = PACK * IN_F                      # valid input lanes per row (18 or 36)
O_W = PACK * OUT_F                     # valid output lanes per row (12 or 24)


# -------------------------------- Pallas kernel --------------------------------
def mlp_kernel(x_ref, w_in_ref, b_in_ref, w_hid_ref, b_hid_ref,
               w_out_ref, b_out_ref, o_ref):
    """One tile of packed rows (PACK points per row) through all 10 layers.

    x_ref:     (tile, X_W)            PACK points x (x,y,t) per row, f32
    w_in_ref:  (X_W, PAD)      bf16   layer 0, packed: lanes [3p,3p+3) -> slot [20p,20p+20)
    b_in_ref:  (1, PAD)        f32
    w_hid_ref: (8, PAD, PAD)   bf16   layers 1..8, block-diagonal (PACK copies of 20x20)
    b_hid_ref: (8, 1, PAD)     f32
    w_out_ref: (PAD, O_W)      bf16   layer 9, packed: slot [20p,20p+20) -> lanes [2p,2p+2)
    b_out_ref: (1, O_W)        f32
    o_ref:     (tile, O_W)            2 outputs per point, compact lanes, f32
    """
    # layer 0: f32 accumulate on the MXU, f32 bias, f32 tanh (EUP), carry as ACT_DTYPE
    z = jnp.dot(x_ref[...].astype(jnp.bfloat16), w_in_ref[...],
                preferred_element_type=jnp.float32)
    h = jnp.tanh(z + b_in_ref[...]).astype(ACT_DTYPE)
    for l in range(NUM_HID):           # static unroll: 8 block-diagonal MXU matmuls
        z = jnp.dot(h.astype(jnp.bfloat16), w_hid_ref[l],
                    preferred_element_type=jnp.float32)
        h = jnp.tanh(z + b_hid_ref[l]).astype(ACT_DTYPE)
    o_ref[...] = jnp.dot(h.astype(jnp.bfloat16), w_out_ref[...],
                         preferred_element_type=jnp.float32) + b_out_ref[...]


# ----------------------------------- wrapper -----------------------------------
def _row_tile(n_rows):
    """Big tiles amortize the ~0.35us/step grid overhead; keep >= 2 grid steps
    where possible so v7x can shard row tiles across its two TensorCores.
    (A CORE_PARALLEL / explicit 2-wide core axis is a follow-up that needs
    on-hardware verification.)"""
    half = -(-n_rows // 2)
    return min(MAX_TILE_ROWS, max(8, ((half + 7) // 8) * 8))


@jax.jit
def model_forward(inputs, params):
    """Equivalent of Model.forward(inputs): uses inputs[:, 0:3], returns (N, 2)."""
    w_in, b_in, w_hid, b_hid, w_out, b_out = params
    x = inputs[:, 0:IN_F].astype(jnp.float32)
    n = x.shape[0]

    n_rows = -(-n // PACK)
    tile = _row_tile(n_rows)
    n_rows_pad = -(-n_rows // tile) * tile
    grid = n_rows_pad // tile

    # Pad (fusible lax.pad, at most one tile of rows) then reshape: row r,
    # lanes [3p, 3p+3) = coords of point r*PACK + p.  The reshape of a contiguous
    # (N,3) array is free; there is no zeros+scatter HBM pass anymore.
    pad_pts = n_rows_pad * PACK - n
    if pad_pts:
        x = jnp.pad(x, ((0, pad_pts), (0, 0)))
    x_rows = x.reshape(n_rows_pad, X_W)

    out_rows = pl.pallas_call(
        mlp_kernel,
        out_shape=jax.ShapeDtypeStruct((n_rows_pad, O_W), jnp.float32),
        grid_spec=pltpu.PrefetchScalarGridSpec(
            num_scalar_prefetch=0,
            grid=(grid,),
            in_specs=[
                pl.BlockSpec((tile, X_W), lambda i: (i, 0)),
                pl.BlockSpec((X_W, PAD), lambda i: (0, 0)),
                pl.BlockSpec((1, PAD), lambda i: (0, 0)),
                pl.BlockSpec((NUM_HID, PAD, PAD), lambda i: (0, 0, 0)),
                pl.BlockSpec((NUM_HID, 1, PAD), lambda i: (0, 0, 0)),
                pl.BlockSpec((PAD, O_W), lambda i: (0, 0)),
                pl.BlockSpec((1, O_W), lambda i: (0, 0)),
            ],
            out_specs=pl.BlockSpec((tile, O_W), lambda i: (i, 0)),
        ),
        compiler_params=pltpu.CompilerParams(
            dimension_semantics=("parallel",),
            # ~6-8 MiB actually used at tile=1024; raise v5e's 16 MiB scoped default
            # with comfortable margin (<= default on v6e/v7x, so a no-op there).
            vmem_limit_bytes=32 * 1024 * 1024,
        ),
    )(x_rows, w_in, b_in, w_hid, b_hid, w_out, b_out)

    # row r, lanes [2p, 2p+2) = outputs of point r*PACK + p; reshape is free,
    # the tail slice only copies the (N, 2) result.
    return out_rows.reshape(n_rows_pad * PACK, OUT_F)[:n]


# ------------------------- deterministic parameters -----------------------------
def init_layer_params(key):
    """Deterministic PyTorch-style Linear init: U[-1/sqrt(fan_in), 1/sqrt(fan_in)]."""
    ws, bs = [], []
    for l in range(NUM_LAYERS):
        fan_in, fan_out = LAYER_DIMS[l], LAYER_DIMS[l + 1]
        key, kw, kb = jax.random.split(key, 3)
        bound = 1.0 / float(fan_in) ** 0.5
        ws.append(jax.random.uniform(kw, (fan_in, fan_out), jnp.float32, -bound, bound))
        bs.append(jax.random.uniform(kb, (fan_out,), jnp.float32, -bound, bound))
    # `visc` parameter exists in the module but is unused by forward(); kept for parity.
    visc = jnp.array([4.99007631268], jnp.float32)
    return ws, bs, visc


def pack_params(ws, bs):
    """Pack per-layer (in,out) weights into the block-diagonal, point-packed form."""
    ws_np = [np.asarray(w, np.float32) for w in ws]
    bs_np = [np.asarray(b, np.float32) for b in bs]
    w_in = np.zeros((X_W, PAD), np.float32)
    b_in = np.zeros((1, PAD), np.float32)
    w_hid = np.zeros((NUM_HID, PAD, PAD), np.float32)
    b_hid = np.zeros((NUM_HID, 1, PAD), np.float32)
    w_out = np.zeros((PAD, O_W), np.float32)
    b_out = np.zeros((1, O_W), np.float32)
    for p in range(PACK):
        # layer 0: input lanes [3p,3p+3) -> hidden slot [20p,20p+20)
        w_in[p * IN_F:(p + 1) * IN_F, p * HID:(p + 1) * HID] = ws_np[0]
        b_in[0, p * HID:(p + 1) * HID] = bs_np[0]
        # layers 1..8: 20x20 block on the diagonal of slot p
        for l in range(NUM_HID):
            w_hid[l, p * HID:(p + 1) * HID, p * HID:(p + 1) * HID] = ws_np[l + 1]
            b_hid[l, 0, p * HID:(p + 1) * HID] = bs_np[l + 1]
        # layer 9: hidden slot [20p,20p+20) -> compact output lanes [2p,2p+2)
        w_out[p * HID:(p + 1) * HID, p * OUT_F:(p + 1) * OUT_F] = ws_np[-1]
        b_out[0, p * OUT_F:(p + 1) * OUT_F] = bs_np[-1]
    # bf16 weights for the bf16-native MXU; f32 accumulation + f32 biases in-kernel.
    return (jnp.asarray(w_in, jnp.bfloat16), jnp.asarray(b_in, jnp.float32),
            jnp.asarray(w_hid, jnp.bfloat16), jnp.asarray(b_hid, jnp.float32),
            jnp.asarray(w_out, jnp.bfloat16), jnp.asarray(b_out, jnp.float32))


# ------------------------------ pure-JAX references ------------------------------
def reference_forward_f32(inputs, ws, bs):
    h = inputs[:, 0:IN_F].astype(jnp.float32)
    for l in range(NUM_LAYERS):
        h = h @ ws[l] + bs[l]
        if l < NUM_LAYERS - 1:
            h = jnp.tanh(h)
    return h


def reference_forward_matched(inputs, ws, bs):
    """Same bf16-operand / f32-accumulate / f32-tanh arithmetic as the kernel."""
    h = inputs[:, 0:IN_F].astype(jnp.float32)
    for l in range(NUM_LAYERS):
        h = jnp.dot(h.astype(jnp.bfloat16), ws[l].astype(jnp.bfloat16),
                    preferred_element_type=jnp.float32) + bs[l]
        if l < NUM_LAYERS - 1:
            h = jnp.tanh(h)
    return h


if __name__ == "__main__":
    key = jax.random.PRNGKey(0)
    kp, kx = jax.random.split(key)
    ws, bs, _visc = init_layer_params(kp)
    params = pack_params(ws, bs)

    # small batch of PINN collocation points; 4 columns so the inputs[:, 0:3] slice
    # of the module is exercised, and N not a multiple of PACK (exercises padding)
    # while still large enough for a 2-step grid.
    n_points = 1000
    inputs = jax.random.normal(kx, (n_points, 4), jnp.float32)

    out = jax.block_until_ready(model_forward(inputs, params))
    assert out.shape == (n_points, OUT_F), out.shape

    # 1) exact-arithmetic check vs a reference using the same bf16/f32-accum math
    ref16 = reference_forward_matched(inputs, ws, bs)
    assert jnp.allclose(out, ref16, atol=1e-3, rtol=1e-3), \
        f"max diff vs matched reference: {float(jnp.max(jnp.abs(out - ref16)))}"

    # 2) sanity check vs full-f32 math (tolerance = accumulated bf16 rounding)
    ref32 = reference_forward_f32(inputs, ws, bs)
    assert jnp.allclose(out, ref32, atol=5e-2, rtol=5e-2), \
        f"max diff vs f32 reference: {float(jnp.max(jnp.abs(out - ref32)))}"

    print("KERNEL_OK")
</pallas_src>

<mosaic_0001>
module attributes {stable_mosaic.version = 11 : i64} {
  func.func @mlp_kernel(%arg0: i32, %arg1: memref<88x18xf32, #tpu.memory_space<vmem>>, %arg2: memref<18x128xbf16, #tpu.memory_space<vmem>>, %arg3: memref<1x128xf32, #tpu.memory_space<vmem>>, %arg4: memref<8x128x128xbf16, #tpu.memory_space<vmem>>, %arg5: memref<8x1x128xf32, #tpu.memory_space<vmem>>, %arg6: memref<128x12xbf16, #tpu.memory_space<vmem>>, %arg7: memref<1x12xf32, #tpu.memory_space<vmem>>, %arg8: memref<88x12xf32, #tpu.memory_space<vmem>>) attributes {dimension_semantics = [#tpu.dimension_semantics<parallel>], iteration_bounds = array<i64: 2>, scalar_prefetch = 0 : i64, scratch_operands = 0 : i64, tpu.core_type = #tpu.core_type<tc>, window_params = [{transform_indices = @transform_0, window_bounds = array<i64: 88, 18>}, {pipeline_mode = #tpu.pipeline_mode<synchronous>, transform_indices = @transform_1, window_bounds = array<i64: 18, 128>}, {pipeline_mode = #tpu.pipeline_mode<synchronous>, transform_indices = @transform_2, window_bounds = array<i64: 1, 128>}, {pipeline_mode = #tpu.pipeline_mode<synchronous>, transform_indices = @transform_3, window_bounds = array<i64: 8, 128, 128>}, {pipeline_mode = #tpu.pipeline_mode<synchronous>, transform_indices = @transform_4, window_bounds = array<i64: 8, 1, 128>}, {pipeline_mode = #tpu.pipeline_mode<synchronous>, transform_indices = @transform_5, window_bounds = array<i64: 128, 12>}, {pipeline_mode = #tpu.pipeline_mode<synchronous>, transform_indices = @transform_6, window_bounds = array<i64: 1, 12>}, {transform_indices = @transform_7, window_bounds = array<i64: 88, 12>}]} {
    %c0 = arith.constant 0 : index
    %c0_0 = arith.constant 0 : index
    %0 = vector.load %arg1[%c0, %c0_0] : memref<88x18xf32, #tpu.memory_space<vmem>>, vector<88x18xf32>
    %1 = arith.truncf %0 : vector<88x18xf32> to vector<88x18xbf16>
    %c0_1 = arith.constant 0 : index
    %c0_2 = arith.constant 0 : index
    %2 = vector.load %arg2[%c0_1, %c0_2] : memref<18x128xbf16, #tpu.memory_space<vmem>>, vector<18x128xbf16>
    %cst = arith.constant dense<0.000000e+00> : vector<88x128xf32>
    %3 = tpu.matmul %1, %2, %cst {dimension_numbers = #tpu.dot_dimension_numbers<[1], [0], [0], [1], [0, 0, 1, 1], [], []>} : vector<88x18xbf16>, vector<18x128xbf16>, vector<88x128xf32> -> vector<88x128xf32>
    %c0_3 = arith.constant 0 : index
    %c0_4 = arith.constant 0 : index
    %4 = vector.load %arg3[%c0_3, %c0_4] : memref<1x128xf32, #tpu.memory_space<vmem>>, vector<1x128xf32>
    %5 = vector.broadcast %4 : vector<1x128xf32> to vector<88x128xf32>
    %6 = arith.addf %3, %5 : vector<88x128xf32>
    %7 = math.tanh %6 : vector<88x128xf32>
    %8 = arith.truncf %7 : vector<88x128xf32> to vector<88x128xbf16>
    %c0_5 = arith.constant 0 : index
    %c0_6 = arith.constant 0 : index
    %c0_7 = arith.constant 0 : index
    %9 = vector.load %arg4[%c0_5, %c0_6, %c0_7] : memref<8x128x128xbf16, #tpu.memory_space<vmem>>, vector<1x128x128xbf16>
    %10 = vector.shape_cast %9 : vector<1x128x128xbf16> to vector<128x128xbf16>
    %cst_8 = arith.constant dense<0.000000e+00> : vector<88x128xf32>
    %11 = tpu.matmul %8, %10, %cst_8 {dimension_numbers = #tpu.dot_dimension_numbers<[1], [0], [0], [1], [0, 0, 1, 1], [], []>} : vector<88x128xbf16>, vector<128x128xbf16>, vector<88x128xf32> -> vector<88x128xf32>
    %c0_9 = arith.constant 0 : index
    %c0_10 = arith.constant 0 : index
    %c0_11 = arith.constant 0 : index
    %12 = vector.load %arg5[%c0_9, %c0_10, %c0_11] : memref<8x1x128xf32, #tpu.memory_space<vmem>>, vector<1x1x128xf32>
    %13 = vector.shape_cast %12 : vector<1x1x128xf32> to vector<1x128xf32>
    %14 = vector.broadcast %13 : vector<1x128xf32> to vector<88x128xf32>
    %15 = arith.addf %11, %14 : vector<88x128xf32>
    %16 = math.tanh %15 : vector<88x128xf32>
    %17 = arith.truncf %16 : vector<88x128xf32> to vector<88x128xbf16>
    %c1 = arith.constant 1 : index
    %c0_12 = arith.constant 0 : index
    %c0_13 = arith.constant 0 : index
    %18 = vector.load %arg4[%c1, %c0_12, %c0_13] : memref<8x128x128xbf16, #tpu.memory_space<vmem>>, vector<1x128x128xbf16>
    %19 = vector.shape_cast %18 : vector<1x128x128xbf16> to vector<128x128xbf16>
    %cst_14 = arith.constant dense<0.000000e+00> : vector<88x128xf32>
    %20 = tpu.matmul %17, %19, %cst_14 {dimension_numbers = #tpu.dot_dimension_numbers<[1], [0], [0], [1], [0, 0, 1, 1], [], []>} : vector<88x128xbf16>, vector<128x128xbf16>, vector<88x128xf32> -> vector<88x128xf32>
    %c1_15 = arith.constant 1 : index
    %c0_16 = arith.constant 0 : index
    %c0_17 = arith.constant 0 : index
    %21 = vector.load %arg5[%c1_15, %c0_16, %c0_17] : memref<8x1x128xf32, #tpu.memory_space<vmem>>, vector<1x1x128xf32>
    %22 = vector.shape_cast %21 : vector<1x1x128xf32> to vector<1x128xf32>
    %23 = vector.broadcast %22 : vector<1x128xf32> to vector<88x128xf32>
    %24 = arith.addf %20, %23 : vector<88x128xf32>
    %25 = math.tanh %24 : vector<88x128xf32>
    %26 = arith.truncf %25 : vector<88x128xf32> to vector<88x128xbf16>
    %c2 = arith.constant 2 : index
    %c0_18 = arith.constant 0 : index
    %c0_19 = arith.constant 0 : index
    %27 = vector.load %arg4[%c2, %c0_18, %c0_19] : memref<8x128x128xbf16, #tpu.memory_space<vmem>>, vector<1x128x128xbf16>
    %28 = vector.shape_cast %27 : vector<1x128x128xbf16> to vector<128x128xbf16>
    %cst_20 = arith.constant dense<0.000000e+00> : vector<88x128xf32>
    %29 = tpu.matmul %26, %28, %cst_20 {dimension_numbers = #tpu.dot_dimension_numbers<[1], [0], [0], [1], [0, 0, 1, 1], [], []>} : vector<88x128xbf16>, vector<128x128xbf16>, vector<88x128xf32> -> vector<88x128xf32>
    %c2_21 = arith.constant 2 : index
    %c0_22 = arith.constant 0 : index
    %c0_23 = arith.constant 0 : index
    %30 = vector.load %arg5[%c2_21, %c0_22, %c0_23] : memref<8x1x128xf32, #tpu.memory_space<vmem>>, vector<1x1x128xf32>
    %31 = vector.shape_cast %30 : vector<1x1x128xf32> to vector<1x128xf32>
    %32 = vector.broadcast %31 : vector<1x128xf32> to vector<88x128xf32>
    %33 = arith.addf %29, %32 : vector<88x128xf32>
    %34 = math.tanh %33 : vector<88x128xf32>
    %35 = arith.truncf %34 : vector<88x128xf32> to vector<88x128xbf16>
    %c3 = arith.constant 3 : index
    %c0_24 = arith.constant 0 : index
    %c0_25 = arith.constant 0 : index
    %36 = vector.load %arg4[%c3, %c0_24, %c0_25] : memref<8x128x128xbf16, #tpu.memory_space<vmem>>, vector<1x128x128xbf16>
    %37 = vector.shape_cast %36 : vector<1x128x128xbf16> to vector<128x128xbf16>
    %cst_26 = arith.constant dense<0.000000e+00> : vector<88x128xf32>
    %38 = tpu.matmul %35, %37, %cst_26 {dimension_numbers = #tpu.dot_dimension_numbers<[1], [0], [0], [1], [0, 0, 1, 1], [], []>} : vector<88x128xbf16>, vector<128x128xbf16>, vector<88x128xf32> -> vector<88x128xf32>
    %c3_27 = arith.constant 3 : index
    %c0_28 = arith.constant 0 : index
    %c0_29 = arith.constant 0 : index
    %39 = vector.load %arg5[%c3_27, %c0_28, %c0_29] : memref<8x1x128xf32, #tpu.memory_space<vmem>>, vector<1x1x128xf32>
    %40 = vector.shape_cast %39 : vector<1x1x128xf32> to vector<1x128xf32>
    %41 = vector.broadcast %40 : vector<1x128xf32> to vector<88x128xf32>
    %42 = arith.addf %38, %41 : vector<88x128xf32>
    %43 = math.tanh %42 : vector<88x128xf32>
    %44 = arith.truncf %43 : vector<88x128xf32> to vector<88x128xbf16>
    %c4 = arith.constant 4 : index
    %c0_30 = arith.constant 0 : index
    %c0_31 = arith.constant 0 : index
    %45 = vector.load %arg4[%c4, %c0_30, %c0_31] : memref<8x128x128xbf16, #tpu.memory_space<vmem>>, vector<1x128x128xbf16>
    %46 = vector.shape_cast %45 : vector<1x128x128xbf16> to vector<128x128xbf16>
    %cst_32 = arith.constant dense<0.000000e+00> : vector<88x128xf32>
    %47 = tpu.matmul %44, %46, %cst_32 {dimension_numbers = #tpu.dot_dimension_numbers<[1], [0], [0], [1], [0, 0, 1, 1], [], []>} : vector<88x128xbf16>, vector<128x128xbf16>, vector<88x128xf32> -> vector<88x128xf32>
    %c4_33 = arith.constant 4 : index
    %c0_34 = arith.constant 0 : index
    %c0_35 = arith.constant 0 : index
    %48 = vector.load %arg5[%c4_33, %c0_34, %c0_35] : memref<8x1x128xf32, #tpu.memory_space<vmem>>, vector<1x1x128xf32>
    %49 = vector.shape_cast %48 : vector<1x1x128xf32> to vector<1x128xf32>
    %50 = vector.broadcast %49 : vector<1x128xf32> to vector<88x128xf32>
    %51 = arith.addf %47, %50 : vector<88x128xf32>
    %52 = math.tanh %51 : vector<88x128xf32>
    %53 = arith.truncf %52 : vector<88x128xf32> to vector<88x128xbf16>
    %c5 = arith.constant 5 : index
    %c0_36 = arith.constant 0 : index
    %c0_37 = arith.constant 0 : index
    %54 = vector.load %arg4[%c5, %c0_36, %c0_37] : memref<8x128x128xbf16, #tpu.memory_space<vmem>>, vector<1x128x128xbf16>
    %55 = vector.shape_cast %54 : vector<1x128x128xbf16> to vector<128x128xbf16>
    %cst_38 = arith.constant dense<0.000000e+00> : vector<88x128xf32>
    %56 = tpu.matmul %53, %55, %cst_38 {dimension_numbers = #tpu.dot_dimension_numbers<[1], [0], [0], [1], [0, 0, 1, 1], [], []>} : vector<88x128xbf16>, vector<128x128xbf16>, vector<88x128xf32> -> vector<88x128xf32>
    %c5_39 = arith.constant 5 : index
    %c0_40 = arith.constant 0 : index
    %c0_41 = arith.constant 0 : index
    %57 = vector.load %arg5[%c5_39, %c0_40, %c0_41] : memref<8x1x128xf32, #tpu.memory_space<vmem>>, vector<1x1x128xf32>
    %58 = vector.shape_cast %57 : vector<1x1x128xf32> to vector<1x128xf32>
    %59 = vector.broadcast %58 : vector<1x128xf32> to vector<88x128xf32>
    %60 = arith.addf %56, %59 : vector<88x128xf32>
    %61 = math.tanh %60 : vector<88x128xf32>
    %62 = arith.truncf %61 : vector<88x128xf32> to vector<88x128xbf16>
    %c6 = arith.constant 6 : index
    %c0_42 = arith.constant 0 : index
    %c0_43 = arith.constant 0 : index
    %63 = vector.load %arg4[%c6, %c0_42, %c0_43] : memref<8x128x128xbf16, #tpu.memory_space<vmem>>, vector<1x128x128xbf16>
    %64 = vector.shape_cast %63 : vector<1x128x128xbf16> to vector<128x128xbf16>
    %cst_44 = arith.constant dense<0.000000e+00> : vector<88x128xf32>
    %65 = tpu.matmul %62, %64, %cst_44 {dimension_numbers = #tpu.dot_dimension_numbers<[1], [0], [0], [1], [0, 0, 1, 1], [], []>} : vector<88x128xbf16>, vector<128x128xbf16>, vector<88x128xf32> -> vector<88x128xf32>
    %c6_45 = arith.constant 6 : index
    %c0_46 = arith.constant 0 : index
    %c0_47 = arith.constant 0 : index
    %66 = vector.load %arg5[%c6_45, %c0_46, %c0_47] : memref<8x1x128xf32, #tpu.memory_space<vmem>>, vector<1x1x128xf32>
    %67 = vector.shape_cast %66 : vector<1x1x128xf32> to vector<1x128xf32>
    %68 = vector.broadcast %67 : vector<1x128xf32> to vector<88x128xf32>
    %69 = arith.addf %65, %68 : vector<88x128xf32>
    %70 = math.tanh %69 : vector<88x128xf32>
    %71 = arith.truncf %70 : vector<88x128xf32> to vector<88x128xbf16>
    %c7 = arith.constant 7 : index
    %c0_48 = arith.constant 0 : index
    %c0_49 = arith.constant 0 : index
    %72 = vector.load %arg4[%c7, %c0_48, %c0_49] : memref<8x128x128xbf16, #tpu.memory_space<vmem>>, vector<1x128x128xbf16>
    %73 = vector.shape_cast %72 : vector<1x128x128xbf16> to vector<128x128xbf16>
    %cst_50 = arith.constant dense<0.000000e+00> : vector<88x128xf32>
    %74 = tpu.matmul %71, %73, %cst_50 {dimension_numbers = #tpu.dot_dimension_numbers<[1], [0], [0], [1], [0, 0, 1, 1], [], []>} : vector<88x128xbf16>, vector<128x128xbf16>, vector<88x128xf32> -> vector<88x128xf32>
    %c7_51 = arith.constant 7 : index
    %c0_52 = arith.constant 0 : index
    %c0_53 = arith.constant 0 : index
    %75 = vector.load %arg5[%c7_51, %c0_52, %c0_53] : memref<8x1x128xf32, #tpu.memory_space<vmem>>, vector<1x1x128xf32>
    %76 = vector.shape_cast %75 : vector<1x1x128xf32> to vector<1x128xf32>
    %77 = vector.broadcast %76 : vector<1x128xf32> to vector<88x128xf32>
    %78 = arith.addf %74, %77 : vector<88x128xf32>
    %79 = math.tanh %78 : vector<88x128xf32>
    %80 = arith.truncf %79 : vector<88x128xf32> to vector<88x128xbf16>
    %c0_54 = arith.constant 0 : index
    %c0_55 = arith.constant 0 : index
    %81 = vector.load %arg6[%c0_54, %c0_55] : memref<128x12xbf16, #tpu.memory_space<vmem>>, vector<128x12xbf16>
    %cst_56 = arith.constant dense<0.000000e+00> : vector<88x12xf32>
    %82 = tpu.matmul %80, %81, %cst_56 {dimension_numbers = #tpu.dot_dimension_numbers<[1], [0], [0], [1], [0, 0, 1, 1], [], []>} : vector<88x128xbf16>, vector<128x12xbf16>, vector<88x12xf32> -> vector<88x12xf32>
    %c0_57 = arith.constant 0 : index
    %c0_58 = arith.constant 0 : index
    %83 = vector.load %arg7[%c0_57, %c0_58] : memref<1x12xf32, #tpu.memory_space<vmem>>, vector<1x12xf32>
    %84 = vector.broadcast %83 : vector<1x12xf32> to vector<88x12xf32>
    %85 = arith.addf %82, %84 : vector<88x12xf32>
    %c0_59 = arith.constant 0 : index
    %c0_60 = arith.constant 0 : index
    %86 = vector.load %arg8[%c0_59, %c0_60] : memref<88x12xf32, #tpu.memory_space<vmem>>, vector<88x12xf32>
    tpu.vector_store %arg8[%c0_59, %c0_60], %85 {strides = array<i32>} : memref<88x12xf32, #tpu.memory_space<vmem>>, vector<88x12xf32>,
    return
  }
  func.func @transform_0(%arg0: i32) -> (i32, i32) {
    %c0_i32 = arith.constant 0 : i32
    %c0_i32_0 = arith.constant 0 : i32
    return %arg0, %c0_i32 : i32, i32
  }
  func.func @transform_1(%arg0: i32) -> (i32, i32) {
    %c0_i32 = arith.constant 0 : i32
    %c0_i32_0 = arith.constant 0 : i32
    %c0_i32_1 = arith.constant 0 : i32
    return %c0_i32, %c0_i32_0 : i32, i32
  }
  func.func @transform_2(%arg0: i32) -> (i32, i32) {
    %c0_i32 = arith.constant 0 : i32
    %c0_i32_0 = arith.constant 0 : i32
    %c0_i32_1 = arith.constant 0 : i32
    return %c0_i32, %c0_i32_0 : i32, i32
  }
  func.func @transform_3(%arg0: i32) -> (i32, i32, i32) {
    %c0_i32 = arith.constant 0 : i32
    %c0_i32_0 = arith.constant 0 : i32
    %c0_i32_1 = arith.constant 0 : i32
    %c0_i32_2 = arith.constant 0 : i32
    return %c0_i32, %c0_i32_0, %c0_i32_1 : i32, i32, i32
  }
  func.func @transform_4(%arg0: i32) -> (i32, i32, i32) {
    %c0_i32 = arith.constant 0 : i32
    %c0_i32_0 = arith.constant 0 : i32
    %c0_i32_1 = arith.constant 0 : i32
    %c0_i32_2 = arith.constant 0 : i32
    return %c0_i32, %c0_i32_0, %c0_i32_1 : i32, i32, i32
  }
  func.func @transform_5(%arg0: i32) -> (i32, i32) {
    %c0_i32 = arith.constant 0 : i32
    %c0_i32_0 = arith.constant 0 : i32
    %c0_i32_1 = arith.constant 0 : i32
    return %c0_i32, %c0_i32_0 : i32, i32
  }
  func.func @transform_6(%arg0: i32) -> (i32, i32) {
    %c0_i32 = arith.constant 0 : i32
    %c0_i32_0 = arith.constant 0 : i32
    %c0_i32_1 = arith.constant 0 : i32
    return %c0_i32, %c0_i32_0 : i32, i32
  }
  func.func @transform_7(%arg0: i32) -> (i32, i32) {
    %c0_i32 = arith.constant 0 : i32
    %c0_i32_0 = arith.constant 0 : i32
    return %arg0, %c0_i32 : i32, i32
  }
}

</mosaic_0001>

<llo_original>
// kernel: model_forward.1
$region0: #{model_forward.1}
  #allocation0 [shape = 'u32[]', space=smem, size = 0x4, offset = 0x4, fixed_abs, tag = 'smem constant byte address 0x4 - core index']
  #allocation1 [shape = 'u32[72,128]{1,0:T(1,128)}', space=vmem, size = 0x9000, scoped, tag = 'internal scratch']
  %s0 = inlined_call_operand.vmem [shape: f32[176,18], index: 0, kind: input, shape index: {}]
  %s1 = inlined_call_operand.vmem [shape: bf16[18,128], index: 1, kind: input, shape index: {}]
  %s2 = inlined_call_operand.vmem [shape: f32[1,128], index: 2, kind: input, shape index: {}]
  %s3 = inlined_call_operand.vmem [shape: bf16[8,128,128], index: 3, kind: input, shape index: {}]
  %s4 = inlined_call_operand.vmem [shape: f32[8,1,128], index: 4, kind: input, shape index: {}]
  %s5 = inlined_call_operand.vmem [shape: bf16[128,12], index: 5, kind: input, shape index: {}]
  %s6 = inlined_call_operand.vmem [shape: f32[1,12], index: 6, kind: input, shape index: {}]
  %s7 = inlined_call_operand.vmem [shape: f32[176,12], index: 7, kind: output, shape index: {}]
  %s8 = sld [smem:[#allocation0]]
  $region61: #{model_forward.1} parent=0
    _
  %s10 = ssub.s32 1, %s8
  %s11 = scalar_select 0, %s10, %s8
  loop: start=0, step=1, limit=4
  $region2: #{model_forward.1} parent=0 // loop_pre_header
    _
  $region3: #{model_forward.1} parent=0 // loop_header
    %s13 = sphi 0, %s17
    %p14 = scmp.ge.s32.totalorder %s13, 4
    %s23 = sphi 0, %s25
    %s26 = sphi 0, %s23
    %s27 = sphi 0, %s26
    %s43 = sphi 0, %s27
    %s47 = sphi 0, %s47
    %s49 = sphi 0, %s47
    %s50 = sphi 0, %s49
    %s64 = sphi 0, %s50
    %s68 = sphi 0, %s68
    %s70 = sphi 0, %s68
    %s71 = sphi 0, %s70
    %s85 = sphi 0, %s71
    %s89 = sphi 0, %s89
    %s91 = sphi 0, %s89
    %s92 = sphi 0, %s91
    %s106 = sphi 0, %s92
    %s110 = sphi 0, %s110
    %s112 = sphi 0, %s110
    %s113 = sphi 0, %s112
    %s127 = sphi 0, %s113
    %s131 = sphi 0, %s131
    %s133 = sphi 0, %s131
    %s134 = sphi 0, %s133
    %s148 = sphi 0, %s134
    %s152 = sphi 0, %s152
    %s154 = sphi 0, %s152
    %s155 = sphi 0, %s154
    %s169 = sphi 0, %s155
    %s175 = sphi 0, %s177
    %s178 = sphi 0, %s175
    %s179 = sphi 0, %s178
    %s195 = sphi 0, %s179
  $region4: #{model_forward.1} parent=0 // loop_header_branch
    %16 = sbr.rel (%p14) target = $region8
  $region5: #{model_forward.1} parent=0 // loop_body
    %s18 = ssub.s32 %s13, 1
    %s19 = ssub.s32 %s13, 2
    %s20 = sadd.s32 %s13, 1
    %s21 = ssub.s32 %s13, %s20
    %p22 = scmp.eq.s32.totalorder %s21, 0
    %s24 = sadd.s32 %s23, 1
    %s25 = scalar_select %p22, %s23, %s24
    %p28 = pneg %p22
    %p29 = scmp.eq.s32.totalorder %s13, 1
    %p30 = por %p28, %p29
    %p31 = scmp.ne.s32.totalorder %s23, %s26
    %p32 = scmp.eq.s32.totalorder %s13, 0
    %p33 = por %p31, %p32
    %p34 = scmp.ne.s32.totalorder %s23, %s26
    %p35 = scmp.eq.s32.totalorder %s18, 1
    %p36 = por %p34, %p35
    %p37 = scmp.ne.s32.totalorder %s26, %s27
    %p38 = scmp.eq.s32.totalorder %s18, 0
    %p39 = por %p37, %p38
    %p40 = scmp.ne.s32.totalorder %s26, %s27
    %p41 = scmp.eq.s32.totalorder %s19, 1
    %p42 = por %p40, %p41
    %p44 = scmp.ne.s32.totalorder %s27, %s43
    %p45 = scmp.eq.s32.totalorder %s19, 0
    %p46 = por %p44, %p45
    %s48 = sadd.s32 %s47, 1
    %p51 = scmp.eq.s32.totalorder %s13, 1
    %p52 = scmp.ne.s32.totalorder %s47, %s49
    %p53 = scmp.eq.s32.totalorder %s13, 0
    %p54 = por %p52, %p53
    %p55 = scmp.ne.s32.totalorder %s47, %s49
    %p56 = scmp.eq.s32.totalorder %s18, 1
    %p57 = por %p55, %p56
    %p58 = scmp.ne.s32.totalorder %s49, %s50
    %p59 = scmp.eq.s32.totalorder %s18, 0
    %p60 = por %p58, %p59
    %p61 = scmp.ne.s32.totalorder %s49, %s50
    %p62 = scmp.eq.s32.totalorder %s19, 1
    %p63 = por %p61, %p62
    %p65 = scmp.ne.s32.totalorder %s50, %s64
    %p66 = scmp.eq.s32.totalorder %s19, 0
    %p67 = por %p65, %p66
    %s69 = sadd.s32 %s68, 1
    %p72 = scmp.eq.s32.totalorder %s13, 1
    %p73 = scmp.ne.s32.totalorder %s68, %s70
    %p74 = scmp.eq.s32.totalorder %s13, 0
    %p75 = por %p73, %p74
    %p76 = scmp.ne.s32.totalorder %s68, %s70
    %p77 = scmp.eq.s32.totalorder %s18, 1
    %p78 = por %p76, %p77
    %p79 = scmp.ne.s32.totalorder %s70, %s71
    %p80 = scmp.eq.s32.totalorder %s18, 0
    %p81 = por %p79, %p80
    %p82 = scmp.ne.s32.totalorder %s70, %s71
    %p83 = scmp.eq.s32.totalorder %s19, 1
    %p84 = por %p82, %p83
    %p86 = scmp.ne.s32.totalorder %s71, %s85
    %p87 = scmp.eq.s32.totalorder %s19, 0
    %p88 = por %p86, %p87
    %s90 = sadd.s32 %s89, 1
    %p93 = scmp.eq.s32.totalorder %s13, 1
    %p94 = scmp.ne.s32.totalorder %s89, %s91
    %p95 = scmp.eq.s32.totalorder %s13, 0
    %p96 = por %p94, %p95
    %p97 = scmp.ne.s32.totalorder %s89, %s91
    %p98 = scmp.eq.s32.totalorder %s18, 1
    %p99 = por %p97, %p98
    %p100 = scmp.ne.s32.totalorder %s91, %s92
    %p101 = scmp.eq.s32.totalorder %s18, 0
    %p102 = por %p100, %p101
    %p103 = scmp.ne.s32.totalorder %s91, %s92
    %p104 = scmp.eq.s32.totalorder %s19, 1
    %p105 = por %p103, %p104
    %p107 = scmp.ne.s32.totalorder %s92, %s106
    %p108 = scmp.eq.s32.totalorder %s19, 0
    %p109 = por %p107, %p108
    %s111 = sadd.s32 %s110, 1
    %p114 = scmp.eq.s32.totalorder %s13, 1
    %p115 = scmp.ne.s32.totalorder %s110, %s112
    %p116 = scmp.eq.s32.totalorder %s13, 0
    %p117 = por %p115, %p116
    %p118 = scmp.ne.s32.totalorder %s110, %s112
    %p119 = scmp.eq.s32.totalorder %s18, 1
    %p120 = por %p118, %p119
    %p121 = scmp.ne.s32.totalorder %s112, %s113
    %p122 = scmp.eq.s32.totalorder %s18, 0
    %p123 = por %p121, %p122
    %p124 = scmp.ne.s32.totalorder %s112, %s113
    %p125 = scmp.eq.s32.totalorder %s19, 1
    %p126 = por %p124, %p125
    %p128 = scmp.ne.s32.totalorder %s113, %s127
    %p129 = scmp.eq.s32.totalorder %s19, 0
    %p130 = por %p128, %p129
    %s132 = sadd.s32 %s131, 1
    %p135 = scmp.eq.s32.totalorder %s13, 1
    %p136 = scmp.ne.s32.totalorder %s131, %s133
    %p137 = scmp.eq.s32.totalorder %s13, 0
    %p138 = por %p136, %p137
    %p139 = scmp.ne.s32.totalorder %s131, %s133
    %p140 = scmp.eq.s32.totalorder %s18, 1
    %p141 = por %p139, %p140
    %p142 = scmp.ne.s32.totalorder %s133, %s134
    %p143 = scmp.eq.s32.totalorder %s18, 0
    %p144 = por %p142, %p143
    %p145 = scmp.ne.s32.totalorder %s133, %s134
    %p146 = scmp.eq.s32.totalorder %s19, 1
    %p147 = por %p145, %p146
    %p149 = scmp.ne.s32.totalorder %s134, %s148
    %p150 = scmp.eq.s32.totalorder %s19, 0
    %p151 = por %p149, %p150
    %s153 = sadd.s32 %s152, 1
    %p156 = scmp.eq.s32.totalorder %s13, 1
    %p157 = scmp.ne.s32.totalorder %s152, %s154
    %p158 = scmp.eq.s32.totalorder %s13, 0
    %p159 = por %p157, %p158
    %p160 = scmp.ne.s32.totalorder %s152, %s154
    %p161 = scmp.eq.s32.totalorder %s18, 1
    %p162 = por %p160, %p161
    %p163 = scmp.ne.s32.totalorder %s154, %s155
    %p164 = scmp.eq.s32.totalorder %s18, 0
    %p165 = por %p163, %p164
    %p166 = scmp.ne.s32.totalorder %s154, %s155
    %p167 = scmp.eq.s32.totalorder %s19, 1
    %p168 = por %p166, %p167
    %p170 = scmp.ne.s32.totalorder %s155, %s169
    %p171 = scmp.eq.s32.totalorder %s19, 0
    %p172 = por %p170, %p171
    %s173 = ssub.s32 %s13, %s20
    %p174 = scmp.eq.s32.totalorder %s173, 0
    %s176 = sadd.s32 %s175, 1
    %s177 = scalar_select %p174, %s175, %s176
    %p180 = pneg %p174
    %p181 = scmp.eq.s32.totalorder %s13, 1
    %p182 = por %p180, %p181
    %p183 = scmp.ne.s32.totalorder %s175, %s178
    %p184 = scmp.eq.s32.totalorder %s13, 0
    %p185 = por %p183, %p184
    %p186 = scmp.ne.s32.totalorder %s175, %s178
    %p187 = scmp.eq.s32.totalorder %s18, 1
    %p188 = por %p186, %p187
    %p189 = scmp.ne.s32.totalorder %s178, %s179
    %p190 = scmp.eq.s32.totalorder %s18, 0
    %p191 = por %p189, %p190
    %p192 = scmp.ne.s32.totalorder %s178, %s179
    %p193 = scmp.eq.s32.totalorder %s19, 1
    %p194 = por %p192, %p193
    %p196 = scmp.ne.s32.totalorder %s179, %s195
    %p197 = scmp.eq.s32.totalorder %s19, 0
    %p198 = por %p196, %p197
    %p199 = scmp.le.s32.totalorder 1, %s13
    %p200 = scmp.lt.s32.totalorder %s13, 3
    %p201 = pnand %p199, %p200
    %p202 = pneg %p201
    // Predicated region
    $region9: #{model_forward.1} parent=5 // pred_check
      _
    $region10: #{model_forward.1} parent=5 // pred_check_branch
      %204 = sbr.rel (%p201) target = $region12
    $region11: #{model_forward.1} parent=5 // pred_region
      %s205 = ssub.s32 %s13, 1
      // Predicated region
      $region13: #{model_forward.1} parent=11 // pred_check
        %p206 = pneg %p60
      $region14: #{model_forward.1} parent=11 // pred_check_branch
        %208 = sbr.rel (%p206) target = $region16
      $region15: #{model_forward.1} parent=11 // pred_region
        _
      $region16: #{model_forward.1} parent=11 // pred_fallthru
        _
      // Predicated region
      $region17: #{model_forward.1} parent=11 // pred_check
        %p209 = pneg %p81
      $region18: #{model_forward.1} parent=11 // pred_check_branch
        %211 = sbr.rel (%p209) target = $region20
      $region19: #{model_forward.1} parent=11 // pred_region
        _
      $region20: #{model_forward.1} parent=11 // pred_fallthru
        _
      // Predicated region
      $region21: #{model_forward.1} parent=11 // pred_check
        %p212 = pneg %p102
      $region22: #{model_forward.1} parent=11 // pred_check_branch
        %214 = sbr.rel (%p212) target = $region24
      $region23: #{model_forward.1} parent=11 // pred_region
        _
      $region24: #{model_forward.1} parent=11 // pred_fallthru
        _
      // Predicated region
      $region25: #{model_forward.1} parent=11 // pred_check
        %p215 = pneg %p123
      $region26: #{model_forward.1} parent=11 // pred_check_branch
        %217 = sbr.rel (%p215) target = $region28
      $region27: #{model_forward.1} parent=11 // pred_region
        _
      $region28: #{model_forward.1} parent=11 // pred_fallthru
        _
      // Predicated region
      $region29: #{model_forward.1} parent=11 // pred_check
        %p218 = pneg %p144
      $region30: #{model_forward.1} parent=11 // pred_check_branch
        %220 = sbr.rel (%p218) target = $region32
      $region31: #{model_forward.1} parent=11 // pred_region
        _
      $region32: #{model_forward.1} parent=11 // pred_fallthru
        _
      // Predicated region
      $region33: #{model_forward.1} parent=11 // pred_check
        %p221 = pneg %p165
      $region34: #{model_forward.1} parent=11 // pred_check_branch
        %223 = sbr.rel (%p221) target = $region36
      $region35: #{model_forward.1} parent=11 // pred_region
        _
      $region36: #{model_forward.1} parent=11 // pred_fallthru
        _
    $region12: #{model_forward.1} parent=5 // pred_fallthru
      _
    %p224 = scmp.lt.s32.totalorder %s13, 2
    // Predicated region
    $region37: #{model_forward.1} parent=5 // pred_check
      %p225 = pneg %p224
    $region38: #{model_forward.1} parent=5 // pred_check_branch
      %227 = sbr.rel (%p225) target = $region40
    $region39: #{model_forward.1} parent=5 // pred_region
      // Predicated region
      $region41: #{model_forward.1} parent=39 // pred_check
        %p228 = pneg %p33
      $region42: #{model_forward.1} parent=39 // pred_check_branch
        %230 = sbr.rel (%p228) target = $region44
      $region43: #{model_forward.1} parent=39 // pred_region
        %s231 = smul.u32 11, %s13
        %p232 = scmp.lt.s32.totalorder %s231, 21
        %s233 = scalar_select %p232, %s231, 21
        %s234 = smul.addr %s233, 8
        %s235 = scalar_lea.vmem %s0, %s234
        %s236 = smul.u32 11, %s13
      $region44: #{model_forward.1} parent=39 // pred_fallthru
        _
    $region40: #{model_forward.1} parent=5 // pred_fallthru
      _
    %p237 = scmp.le.s32.totalorder 1, %s13
    %p238 = scmp.lt.s32.totalorder %s13, 3
    %p239 = pnand %p237, %p238
    %p240 = pneg %p239
    // Predicated region
    $region45: #{model_forward.1} parent=5 // pred_check
      _
    $region46: #{model_forward.1} parent=5 // pred_check_branch
      %242 = sbr.rel (%p239) target = $region48
    $region47: #{model_forward.1} parent=5 // pred_region
      %s243 = ssub.s32 %s13, 1
      %s244 = smul.u32 11, %s18
      %p245 = scmp.lt.s32.totalorder %s244, 21
      %s246 = scalar_select %p245, %s244, 21
      %s247 = smul.addr %s246, 8
      %s248 = scalar_lea.vmem %s0, %s247
      %p249 = pneg %p39
      %p250 = pneg %p36
      %p251 = pneg %p60
      %p252 = pneg %p57
      %p253 = pneg %p81
      %p254 = pneg %p78
      %p255 = pneg %p102
      %p256 = pneg %p99
      %p257 = pneg %p123
      %p258 = pneg %p120
      %p259 = pneg %p144
      %p260 = pneg %p141
      %p261 = pneg %p165
      %p262 = pneg %p162
      %p263 = pneg %p191
      %p264 = pneg %p188
      %s265 = smul.u32 11, %s18
      %p266 = scmp.lt.s32.totalorder %s265, 21
      %s267 = scalar_select %p266, %s265, 21
      %s268 = smul.addr %s267, 8
      %s269 = scalar_lea.vmem %s7, %s268
      %s270 = smul.u32 11, %s18
      %p271 = scmp.lt.s32.totalorder %s270, 21
      %s272 = scalar_select %p271, %s270, 21
      %s273 = smul.addr %s272, 8
      %s274 = scalar_lea.vmem %s0, %s273
      %s275 = smul.u32 11, %s18
      %s276 = smul.u32 11, %s18
      %p277 = scmp.lt.s32.totalorder %s276, 21
      %s278 = scalar_select %p277, %s276, 21
      %s279 = smul.addr %s278, 8
      %s280 = scalar_lea.vmem %s7, %s279
      %s281 = smul.u32 11, %s18
      %v283 = vld [vmem:[%s274] sm:$0xff]
      %v284 = vld [vmem:[%s274 + $0x8] sm:$0xff]
      %v285 = vld [vmem:[%s274 + $0x10] sm:$0xff]
      %v286 = vld [vmem:[%s274 + $0x18] sm:$0xff]
      %v287 = vld [vmem:[%s274 + $0x20] sm:$0xff]
      %v288 = vld [vmem:[%s274 + $0x28] sm:$0xff]
      %v289 = vld [vmem:[%s274 + $0x30] sm:$0xff]
      %v290 = vld [vmem:[%s274 + $0x38] sm:$0xff]
      %v291 = vld [vmem:[%s274 + $0x40] sm:$0xff]
      %v292 = vld [vmem:[%s274 + $0x48] sm:$0xff]
      %v293 = vld [vmem:[%s274 + $0x50] sm:$0xff]
      %v294 = vpack.c.bf16 %v284, %v283
      %v295 = vpack.c.bf16 %v286, %v285
      %v296 = vpack.c.bf16 %v288, %v287
      %v297 = vpack.c.bf16 %v290, %v289
      %v298 = vpack.c.bf16 %v292, %v291
      %v299 = vpack.c.bf16 %v293, %v293
      %v300 = vld [vmem:[%s1] sm:$0xf]
      %v301 = vld [vmem:[%s1 + $0x4] sm:$0xf]
      %v302 = vld [vmem:[%s1 + $0x8] sm:$0x1]
      %v303 = vld [vmem:[%s2] sm:$0x1]
      %v305 = vperm.slane %v303, 0
      %v310 = vunpack.c.l.b16 %v300
      %v311 = vunpack.c.l.b16 %v301
      %v312 = vunpack.c.l.b16 %v302
      %v313 = vpack.c.b16 %v311, %v310
      %v314 = vpack.c.b16 %v312, %v312
      %vm316 = vcmask 146432
      %v318 = vsel %vm316, %v294, 0
      %v321 = vsel %vm316, %v295, 0
      %v324 = vsel %vm316, %v296, 0
      %v327 = vsel %vm316, %v297, 0
      %v330 = vsel %vm316, %v298, 0
      %v333 = vsel %vm316, %v299, 0
      %vm335 = vcmask 1040384
      %v337 = vsel %vm335, %v314, 0
      %339 = vmatpush.bf16.msra.mxu0 0
      %340 = vmatpush.bf16.msra.mxu0 0
      %341 = vmatpush.bf16.msra.mxu0 0
      %342 = vmatpush.bf16.msra.mxu0 0
      %343 = vmatpush.bf16.msra.mxu0 0
      %344 = vmatpush.bf16.msra.mxu0 0
      %345 = vmatpush.bf16.msra.mxu0 %v337
      %346 = vmatpush.bf16.msra.mxu0 %v313
      %347 = vmatmul.bf16.gmra.mxu0 %v318
      %v348 = vpop.f32.mrf.mxu0
      %v349 = vadd.f32 %v305, %v348
      %v350 = vpop.f32.mrf.mxu0
      %v351 = vadd.f32 %v305, %v350
      %352 = vmatmul.bf16.gmra.mxu0 %v321
      %v353 = vpop.f32.mrf.mxu0
      %v354 = vadd.f32 %v305, %v353
      %v355 = vpop.f32.mrf.mxu0
      %v356 = vadd.f32 %v305, %v355
      %357 = vmatmul.bf16.gmra.mxu0 %v324
      %v358 = vpop.f32.mrf.mxu0
      %v359 = vadd.f32 %v305, %v358
      %v360 = vpop.f32.mrf.mxu0
      %v361 = vadd.f32 %v305, %v360
      %362 = vmatmul.bf16.gmra.mxu0 %v327
      %v363 = vpop.f32.mrf.mxu0
      %v364 = vadd.f32 %v305, %v363
      %v365 = vpop.f32.mrf.mxu0
      %v366 = vadd.f32 %v305, %v365
      %367 = vmatmul.bf16.gmra.mxu0 %v330
      %v368 = vpop.f32.mrf.mxu0
      %v369 = vadd.f32 %v305, %v368
      %v370 = vpop.f32.mrf.mxu0
      %v371 = vadd.f32 %v305, %v370
      %372 = vmatmul.bf16.gmra.mxu0 %v333
      %v373 = vpop.f32.mrf.mxu0
      %v374 = vadd.f32 %v305, %v373
      %v375 = vpop.f32.mrf.mxu0
      %376 = vdwg.mxu0
      %v377 = vtanh.pop %v349
      %v378 = vtanh.pop %v351
      %v379 = vtanh.pop %v354
      %v380 = vtanh.pop %v356
      %v381 = vtanh.pop %v359
      %v382 = vtanh.pop %v361
      %v383 = vtanh.pop %v364
      %v384 = vtanh.pop %v366
      %v385 = vtanh.pop %v369
      %v386 = vtanh.pop %v371
      %v387 = vtanh.pop %v374
      %v388 = vpack.c.bf16 %v378, %v377
      %v389 = vpack.c.bf16 %v380, %v379
      %v390 = vpack.c.bf16 %v382, %v381
      %v391 = vpack.c.bf16 %v384, %v383
      %v392 = vpack.c.bf16 %v386, %v385
      %v393 = vpack.c.bf16 %v387, %v387
      %v394 = vld [vmem:[%s3] sm:$0xf]
      %v395 = vld [vmem:[%s3 + $0x4] sm:$0xf]
      %v396 = vld [vmem:[%s3 + $0x8] sm:$0xf]
      %v397 = vld [vmem:[%s3 + $0xc] sm:$0xf]
      %v398 = vld [vmem:[%s3 + $0x10] sm:$0xf]
      %v399 = vld [vmem:[%s3 + $0x14] sm:$0xf]
      %v400 = vld [vmem:[%s3 + $0x18] sm:$0xf]
      %v401 = vld [vmem:[%s3 + $0x1c] sm:$0xf]
      %v402 = vld [vmem:[%s3 + $0x20] sm:$0xf]
      %v403 = vld [vmem:[%s3 + $0x24] sm:$0xf]
      %v404 = vld [vmem:[%s3 + $0x28] sm:$0xf]
      %v405 = vld [vmem:[%s3 + $0x2c] sm:$0xf]
      %v406 = vld [vmem:[%s3 + $0x30] sm:$0xf]
      %v407 = vld [vmem:[%s3 + $0x34] sm:$0xf]
      %v408 = vld [vmem:[%s3 + $0x38] sm:$0xf]
      %v409 = vld [vmem:[%s3 + $0x3c] sm:$0xf]
      %v410 = vld [vmem:[%s4] sm:$0x1]
      %v412 = vperm.slane %v410, 0
      %v430 = vunpack.c.l.b16 %v394
      %v431 = vunpack.c.l.b16 %v395
      %v432 = vunpack.c.l.b16 %v396
      %v433 = vunpack.c.l.b16 %v397
      %v434 = vunpack.c.l.b16 %v398
      %v435 = vunpack.c.l.b16 %v399
      %v436 = vunpack.c.l.b16 %v400
      %v437 = vunpack.c.l.b16 %v401
      %v438 = vunpack.c.l.b16 %v402
      %v439 = vunpack.c.l.b16 %v403
      %v440 = vunpack.c.l.b16 %v404
      %v441 = vunpack.c.l.b16 %v405
      %v442 = vunpack.c.l.b16 %v406
      %v443 = vunpack.c.l.b16 %v407
      %v444 = vunpack.c.l.b16 %v408
      %v445 = vunpack.c.l.b16 %v409
      %v446 = vpack.c.b16 %v431, %v430
      %v447 = vpack.c.b16 %v433, %v432
      %v448 = vpack.c.b16 %v435, %v434
      %v449 = vpack.c.b16 %v437, %v436
      %v450 = vpack.c.b16 %v439, %v438
      %v451 = vpack.c.b16 %v441, %v440
      %v452 = vpack.c.b16 %v443, %v442
      %v453 = vpack.c.b16 %v445, %v444
      %462 = vmatpush.bf16.msra.mxu0 %v453
      %463 = vmatpush.bf16.msra.mxu0 %v452
      %464 = vmatpush.bf16.msra.mxu0 %v451
      %465 = vmatpush.bf16.msra.mxu0 %v450
      %466 = vmatpush.bf16.msra.mxu0 %v449
      %467 = vmatpush.bf16.msra.mxu0 %v448
      %468 = vmatpush.bf16.msra.mxu0 %v447
      %469 = vmatpush.bf16.msra.mxu0 %v446
      %470 = vmatmul.bf16.gmra.mxu0 %v388
      %v471 = vpop.f32.mrf.mxu0
      %v472 = vadd.f32 %v412, %v471
      %v473 = vpop.f32.mrf.mxu0
      %v474 = vadd.f32 %v412, %v473
      %475 = vmatmul.bf16.gmra.mxu0 %v389
      %v476 = vpop.f32.mrf.mxu0
      %v477 = vadd.f32 %v412, %v476
      %v478 = vpop.f32.mrf.mxu0
      %v479 = vadd.f32 %v412, %v478
      %480 = vmatmul.bf16.gmra.mxu0 %v390
      %v481 = vpop.f32.mrf.mxu0
      %v482 = vadd.f32 %v412, %v481
      %v483 = vpop.f32.mrf.mxu0
      %v484 = vadd.f32 %v412, %v483
      %485 = vmatmul.bf16.gmra.mxu0 %v391
      %v486 = vpop.f32.mrf.mxu0
      %v487 = vadd.f32 %v412, %v486
      %v488 = vpop.f32.mrf.mxu0
      %v489 = vadd.f32 %v412, %v488
      %490 = vmatmul.bf16.gmra.mxu0 %v392
      %v491 = vpop.f32.mrf.mxu0
      %v492 = vadd.f32 %v412, %v491
      %v493 = vpop.f32.mrf.mxu0
      %v494 = vadd.f32 %v412, %v493
      %495 = vmatmul.bf16.gmra.mxu0 %v393
      %v496 = vpop.f32.mrf.mxu0
      %v497 = vadd.f32 %v412, %v496
      %v498 = vpop.f32.mrf.mxu0
      %499 = vdwg.mxu0
      %v500 = vtanh.pop %v472
      %v501 = vtanh.pop %v474
      %v502 = vtanh.pop %v477
      %v503 = vtanh.pop %v479
      %v504 = vtanh.pop %v482
      %v505 = vtanh.pop %v484
      %v506 = vtanh.pop %v487
      %v507 = vtanh.pop %v489
      %v508 = vtanh.pop %v492
      %v509 = vtanh.pop %v494
      %v510 = vtanh.pop %v497
      %v511 = vpack.c.bf16 %v501, %v500
      %v512 = vpack.c.bf16 %v503, %v502
      %v513 = vpack.c.bf16 %v505, %v504
      %v514 = vpack.c.bf16 %v507, %v506
      %v515 = vpack.c.bf16 %v509, %v508
      %v516 = vpack.c.bf16 %v510, %v510
      %s517 = scalar_lea.vmem %s3, 64
      %v518 = vld [vmem:[%s517] sm:$0xf]
      %v519 = vld [vmem:[%s517 + $0x4] sm:$0xf]
      %v520 = vld [vmem:[%s517 + $0x8] sm:$0xf]
      %v521 = vld [vmem:[%s517 + $0xc] sm:$0xf]
      %v522 = vld [vmem:[%s517 + $0x10] sm:$0xf]
      %v523 = vld [vmem:[%s517 + $0x14] sm:$0xf]
      %v524 = vld [vmem:[%s517 + $0x18] sm:$0xf]
      %v525 = vld [vmem:[%s517 + $0x1c] sm:$0xf]
      %v526 = vld [vmem:[%s517 + $0x20] sm:$0xf]
      %v527 = vld [vmem:[%s517 + $0x24] sm:$0xf]
      %v528 = vld [vmem:[%s517 + $0x28] sm:$0xf]
      %v529 = vld [vmem:[%s517 + $0x2c] sm:$0xf]
      %v530 = vld [vmem:[%s517 + $0x30] sm:$0xf]
      %v531 = vld [vmem:[%s517 + $0x34] sm:$0xf]
      %v532 = vld [vmem:[%s517 + $0x38] sm:$0xf]
      %v533 = vld [vmem:[%s517 + $0x3c] sm:$0xf]
      %s534 = scalar_lea.vmem %s4, 1
      %v535 = vld [vmem:[%s534] sm:$0x1]
      %v537 = vperm.slane %v535, 0
      %v555 = vunpack.c.l.b16 %v518
      %v556 = vunpack.c.l.b16 %v519
      %v557 = vunpack.c.l.b16 %v520
      %v558 = vunpack.c.l.b16 %v521
      %v559 = vunpack.c.l.b16 %v522
      %v560 = vunpack.c.l.b16 %v523
      %v561 = vunpack.c.l.b16 %v524
      %v562 = vunpack.c.l.b16 %v525
      %v563 = vunpack.c.l.b16 %v526
      %v564 = vunpack.c.l.b16 %v527
      %v565 = vunpack.c.l.b16 %v528
      %v566 = vunpack.c.l.b16 %v529
      %v567 = vunpack.c.l.b16 %v530
      %v568 = vunpack.c.l.b16 %v531
      %v569 = vunpack.c.l.b16 %v532
      %v570 = vunpack.c.l.b16 %v533
      %v571 = vpack.c.b16 %v556, %v555
      %v572 = vpack.c.b16 %v558, %v557
      %v573 = vpack.c.b16 %v560, %v559
      %v574 = vpack.c.b16 %v562, %v561
      %v575 = vpack.c.b16 %v564, %v563
      %v576 = vpack.c.b16 %v566, %v565
      %v577 = vpack.c.b16 %v568, %v567
      %v578 = vpack.c.b16 %v570, %v569
      %587 = vmatpush.bf16.msra.mxu0 %v578
      %588 = vmatpush.bf16.msra.mxu0 %v577
      %589 = vmatpush.bf16.msra.mxu0 %v576
      %590 = vmatpush.bf16.msra.mxu0 %v575
      %591 = vmatpush.bf16.msra.mxu0 %v574
      %592 = vmatpush.bf16.msra.mxu0 %v573
      %593 = vmatpush.bf16.msra.mxu0 %v572
      %594 = vmatpush.bf16.msra.mxu0 %v571
      %595 = vmatmul.bf16.gmra.mxu0 %v511
      %v596 = vpop.f32.mrf.mxu0
      %v597 = vadd.f32 %v537, %v596
      %v598 = vpop.f32.mrf.mxu0
      %v599 = vadd.f32 %v537, %v598
      %600 = vmatmul.bf16.gmra.mxu0 %v512
      %v601 = vpop.f32.mrf.mxu0
      %v602 = vadd.f32 %v537, %v601
      %v603 = vpop.f32.mrf.mxu0
      %v604 = vadd.f32 %v537, %v603
      %605 = vmatmul.bf16.gmra.mxu0 %v513
      %v606 = vpop.f32.mrf.mxu0
      %v607 = vadd.f32 %v537, %v606
      %v608 = vpop.f32.mrf.mxu0
      %v609 = vadd.f32 %v537, %v608
      %610 = vmatmul.bf16.gmra.mxu0 %v514
      %v611 = vpop.f32.mrf.mxu0
      %v612 = vadd.f32 %v537, %v611
      %v613 = vpop.f32.mrf.mxu0
      %v614 = vadd.f32 %v537, %v613
      %615 = vmatmul.bf16.gmra.mxu0 %v515
      %v616 = vpop.f32.mrf.mxu0
      %v617 = vadd.f32 %v537, %v616
      %v618 = vpop.f32.mrf.mxu0
      %v619 = vadd.f32 %v537, %v618
      %620 = vmatmul.bf16.gmra.mxu0 %v516
      %v621 = vpop.f32.mrf.mxu0
      %v622 = vadd.f32 %v537, %v621
      %v623 = vpop.f32.mrf.mxu0
      %624 = vdwg.mxu0
      %v625 = vtanh.pop %v597
      %v626 = vtanh.pop %v599
      %v627 = vtanh.pop %v602
      %v628 = vtanh.pop %v604
      %v629 = vtanh.pop %v607
      %v630 = vtanh.pop %v609
      %v631 = vtanh.pop %v612
      %v632 = vtanh.pop %v614
      %v633 = vtanh.pop %v617
      %v634 = vtanh.pop %v619
      %v635 = vtanh.pop %v622
      %v636 = vpack.c.bf16 %v626, %v625
      %v637 = vpack.c.bf16 %v628, %v627
      %v638 = vpack.c.bf16 %v630, %v629
      %v639 = vpack.c.bf16 %v632, %v631
      %v640 = vpack.c.bf16 %v634, %v633
      %v641 = vpack.c.bf16 %v635, %v635
      %s642 = scalar_lea.vmem %s3, 128
      %v643 = vld [vmem:[%s642] sm:$0xf]
      %v644 = vld [vmem:[%s642 + $0x4] sm:$0xf]
      %v645 = vld [vmem:[%s642 + $0x8] sm:$0xf]
      %v646 = vld [vmem:[%s642 + $0xc] sm:$0xf]
      %v647 = vld [vmem:[%s642 + $0x10] sm:$0xf]
      %v648 = vld [vmem:[%s642 + $0x14] sm:$0xf]
      %v649 = vld [vmem:[%s642 + $0x18] sm:$0xf]
      %v650 = vld [vmem:[%s642 + $0x1c] sm:$0xf]
      %v651 = vld [vmem:[%s642 + $0x20] sm:$0xf]
      %v652 = vld [vmem:[%s642 + $0x24] sm:$0xf]
      %v653 = vld [vmem:[%s642 + $0x28] sm:$0xf]
      %v654 = vld [vmem:[%s642 + $0x2c] sm:$0xf]
      %v655 = vld [vmem:[%s642 + $0x30] sm:$0xf]
      %v656 = vld [vmem:[%s642 + $0x34] sm:$0xf]
      %v657 = vld [vmem:[%s642 + $0x38] sm:$0xf]
      %v658 = vld [vmem:[%s642 + $0x3c] sm:$0xf]
      %s659 = scalar_lea.vmem %s4, 2
      %v660 = vld [vmem:[%s659] sm:$0x1]
      %v662 = vperm.slane %v660, 0
      %v680 = vunpack.c.l.b16 %v643
      %v681 = vunpack.c.l.b16 %v644
      %v682 = vunpack.c.l.b16 %v645
      %v683 = vunpack.c.l.b16 %v646
      %v684 = vunpack.c.l.b16 %v647
      %v685 = vunpack.c.l.b16 %v648
      %v686 = vunpack.c.l.b16 %v649
      %v687 = vunpack.c.l.b16 %v650
      %v688 = vunpack.c.l.b16 %v651
      %v689 = vunpack.c.l.b16 %v652
      %v690 = vunpack.c.l.b16 %v653
      %v691 = vunpack.c.l.b16 %v654
      %v692 = vunpack.c.l.b16 %v655
      %v693 = vunpack.c.l.b16 %v656
      %v694 = vunpack.c.l.b16 %v657
      %v695 = vunpack.c.l.b16 %v658
      %v696 = vpack.c.b16 %v681, %v680
      %v697 = vpack.c.b16 %v683, %v682
      %v698 = vpack.c.b16 %v685, %v684
      %v699 = vpack.c.b16 %v687, %v686
      %v700 = vpack.c.b16 %v689, %v688
      %v701 = vpack.c.b16 %v691, %v690
      %v702 = vpack.c.b16 %v693, %v692
      %v703 = vpack.c.b16 %v695, %v694
      %712 = vmatpush.bf16.msra.mxu0 %v703
      %713 = vmatpush.bf16.msra.mxu0 %v702
      %714 = vmatpush.bf16.msra.mxu0 %v701
      %715 = vmatpush.bf16.msra.mxu0 %v700
      %716 = vmatpush.bf16.msra.mxu0 %v699
      %717 = vmatpush.bf16.msra.mxu0 %v698
      %718 = vmatpush.bf16.msra.mxu0 %v697
      %719 = vmatpush.bf16.msra.mxu0 %v696
      %720 = vmatmul.bf16.gmra.mxu0 %v636
      %v721 = vpop.f32.mrf.mxu0
      %v722 = vadd.f32 %v662, %v721
      %v723 = vpop.f32.mrf.mxu0
      %v724 = vadd.f32 %v662, %v723
      %725 = vmatmul.bf16.gmra.mxu0 %v637
      %v726 = vpop.f32.mrf.mxu0
      %v727 = vadd.f32 %v662, %v726
      %v728 = vpop.f32.mrf.mxu0
      %v729 = vadd.f32 %v662, %v728
      %730 = vmatmul.bf16.gmra.mxu0 %v638
      %v731 = vpop.f32.mrf.mxu0
      %v732 = vadd.f32 %v662, %v731
      %v733 = vpop.f32.mrf.mxu0
      %v734 = vadd.f32 %v662, %v733
      %735 = vmatmul.bf16.gmra.mxu0 %v639
      %v736 = vpop.f32.mrf.mxu0
      %v737 = vadd.f32 %v662, %v736
      %v738 = vpop.f32.mrf.mxu0
      %v739 = vadd.f32 %v662, %v738
      %740 = vmatmul.bf16.gmra.mxu0 %v640
      %v741 = vpop.f32.mrf.mxu0
      %v742 = vadd.f32 %v662, %v741
      %v743 = vpop.f32.mrf.mxu0
      %v744 = vadd.f32 %v662, %v743
      %745 = vmatmul.bf16.gmra.mxu0 %v641
      %v746 = vpop.f32.mrf.mxu0
      %v747 = vadd.f32 %v662, %v746
      %v748 = vpop.f32.mrf.mxu0
      %749 = vdwg.mxu0
      %v750 = vtanh.pop %v722
      %v751 = vtanh.pop %v724
      %v752 = vtanh.pop %v727
      %v753 = vtanh.pop %v729
      %v754 = vtanh.pop %v732
      %v755 = vtanh.pop %v734
      %v756 = vtanh.pop %v737
      %v757 = vtanh.pop %v739
      %v758 = vtanh.pop %v742
      %v759 = vtanh.pop %v744
      %v760 = vtanh.pop %v747
      %v761 = vpack.c.bf16 %v751, %v750
      %v762 = vpack.c.bf16 %v753, %v752
      %v763 = vpack.c.bf16 %v755, %v754
      %v764 = vpack.c.bf16 %v757, %v756
      %v765 = vpack.c.bf16 %v759, %v758
      %v766 = vpack.c.bf16 %v760, %v760
      %s767 = scalar_lea.vmem %s3, 192
      %v768 = vld [vmem:[%s767] sm:$0xf]
      %v769 = vld [vmem:[%s767 + $0x4] sm:$0xf]
      %v770 = vld [vmem:[%s767 + $0x8] sm:$0xf]
      %v771 = vld [vmem:[%s767 + $0xc] sm:$0xf]
      %v772 = vld [vmem:[%s767 + $0x10] sm:$0xf]
      %v773 = vld [vmem:[%s767 + $0x14] sm:$0xf]
      %v774 = vld [vmem:[%s767 + $0x18] sm:$0xf]
      %v775 = vld [vmem:[%s767 + $0x1c] sm:$0xf]
      %v776 = vld [vmem:[%s767 + $0x20] sm:$0xf]
      %v777 = vld [vmem:[%s767 + $0x24] sm:$0xf]
      %v778 = vld [vmem:[%s767 + $0x28] sm:$0xf]
      %v779 = vld [vmem:[%s767 + $0x2c] sm:$0xf]
      %v780 = vld [vmem:[%s767 + $0x30] sm:$0xf]
      %v781 = vld [vmem:[%s767 + $0x34] sm:$0xf]
      %v782 = vld [vmem:[%s767 + $0x38] sm:$0xf]
      %v783 = vld [vmem:[%s767 + $0x3c] sm:$0xf]
      %s784 = scalar_lea.vmem %s4, 3
      %v785 = vld [vmem:[%s784] sm:$0x1]
      %v787 = vperm.slane %v785, 0
      %v805 = vunpack.c.l.b16 %v768
      %v806 = vunpack.c.l.b16 %v769
      %v807 = vunpack.c.l.b16 %v770
      %v808 = vunpack.c.l.b16 %v771
      %v809 = vunpack.c.l.b16 %v772
      %v810 = vunpack.c.l.b16 %v773
      %v811 = vunpack.c.l.b16 %v774
      %v812 = vunpack.c.l.b16 %v775
      %v813 = vunpack.c.l.b16 %v776
      %v814 = vunpack.c.l.b16 %v777
      %v815 = vunpack.c.l.b16 %v778
      %v816 = vunpack.c.l.b16 %v779
      %v817 = vunpack.c.l.b16 %v780
      %v818 = vunpack.c.l.b16 %v781
      %v819 = vunpack.c.l.b16 %v782
      %v820 = vunpack.c.l.b16 %v783
      %v821 = vpack.c.b16 %v806, %v805
      %v822 = vpack.c.b16 %v808, %v807
      %v823 = vpack.c.b16 %v810, %v809
      %v824 = vpack.c.b16 %v812, %v811
      %v825 = vpack.c.b16 %v814, %v813
      %v826 = vpack.c.b16 %v816, %v815
      %v827 = vpack.c.b16 %v818, %v817
      %v828 = vpack.c.b16 %v820, %v819
      %837 = vmatpush.bf16.msra.mxu0 %v828
      %838 = vmatpush.bf16.msra.mxu0 %v827
      %839 = vmatpush.bf16.msra.mxu0 %v826
      %840 = vmatpush.bf16.msra.mxu0 %v825
      %841 = vmatpush.bf16.msra.mxu0 %v824
      %842 = vmatpush.bf16.msra.mxu0 %v823
      %843 = vmatpush.bf16.msra.mxu0 %v822
      %844 = vmatpush.bf16.msra.mxu0 %v821
      %845 = vmatmul.bf16.gmra.mxu0 %v761
      %v846 = vpop.f32.mrf.mxu0
      %v847 = vadd.f32 %v787, %v846
      %v848 = vpop.f32.mrf.mxu0
      %v849 = vadd.f32 %v787, %v848
      %850 = vmatmul.bf16.gmra.mxu0 %v762
      %v851 = vpop.f32.mrf.mxu0
      %v852 = vadd.f32 %v787, %v851
      %v853 = vpop.f32.mrf.mxu0
      %v854 = vadd.f32 %v787, %v853
      %855 = vmatmul.bf16.gmra.mxu0 %v763
      %v856 = vpop.f32.mrf.mxu0
      %v857 = vadd.f32 %v787, %v856
      %v858 = vpop.f32.mrf.mxu0
      %v859 = vadd.f32 %v787, %v858
      %860 = vmatmul.bf16.gmra.mxu0 %v764
      %v861 = vpop.f32.mrf.mxu0
      %v862 = vadd.f32 %v787, %v861
      %v863 = vpop.f32.mrf.mxu0
      %v864 = vadd.f32 %v787, %v863
      %865 = vmatmul.bf16.gmra.mxu0 %v765
      %v866 = vpop.f32.mrf.mxu0
      %v867 = vadd.f32 %v787, %v866
      %v868 = vpop.f32.mrf.mxu0
      %v869 = vadd.f32 %v787, %v868
      %870 = vmatmul.bf16.gmra.mxu0 %v766
      %v871 = vpop.f32.mrf.mxu0
      %v872 = vadd.f32 %v787, %v871
      %v873 = vpop.f32.mrf.mxu0
      %874 = vdwg.mxu0
      %v875 = vtanh.pop %v847
      %v876 = vtanh.pop %v849
      %v877 = vtanh.pop %v852
      %v878 = vtanh.pop %v854
      %v879 = vtanh.pop %v857
      %v880 = vtanh.pop %v859
      %v881 = vtanh.pop %v862
      %v882 = vtanh.pop %v864
      %v883 = vtanh.pop %v867
      %v884 = vtanh.pop %v869
      %v885 = vtanh.pop %v872
      %v886 = vpack.c.bf16 %v876, %v875
      %v887 = vpack.c.bf16 %v878, %v877
      %v888 = vpack.c.bf16 %v880, %v879
      %v889 = vpack.c.bf16 %v882, %v881
      %v890 = vpack.c.bf16 %v884, %v883
      %v891 = vpack.c.bf16 %v885, %v885
      %s892 = scalar_lea.vmem %s3, 256
      %v893 = vld [vmem:[%s892] sm:$0xf]
      %v894 = vld [vmem:[%s892 + $0x4] sm:$0xf]
      %v895 = vld [vmem:[%s892 + $0x8] sm:$0xf]
      %v896 = vld [vmem:[%s892 + $0xc] sm:$0xf]
      %v897 = vld [vmem:[%s892 + $0x10] sm:$0xf]
      %v898 = vld [vmem:[%s892 + $0x14] sm:$0xf]
      %v899 = vld [vmem:[%s892 + $0x18] sm:$0xf]
      %v900 = vld [vmem:[%s892 + $0x1c] sm:$0xf]
      %v901 = vld [vmem:[%s892 + $0x20] sm:$0xf]
      %v902 = vld [vmem:[%s892 + $0x24] sm:$0xf]
      %v903 = vld [vmem:[%s892 + $0x28] sm:$0xf]
      %v904 = vld [vmem:[%s892 + $0x2c] sm:$0xf]
      %v905 = vld [vmem:[%s892 + $0x30] sm:$0xf]
      %v906 = vld [vmem:[%s892 + $0x34] sm:$0xf]
      %v907 = vld [vmem:[%s892 + $0x38] sm:$0xf]
      %v908 = vld [vmem:[%s892 + $0x3c] sm:$0xf]
      %s909 = scalar_lea.vmem %s4, 4
      %v910 = vld [vmem:[%s909] sm:$0x1]
      %v912 = vperm.slane %v910, 0
      %v930 = vunpack.c.l.b16 %v893
      %v931 = vunpack.c.l.b16 %v894
      %v932 = vunpack.c.l.b16 %v895
      %v933 = vunpack.c.l.b16 %v896
      %v934 = vunpack.c.l.b16 %v897
      %v935 = vunpack.c.l.b16 %v898
      %v936 = vunpack.c.l.b16 %v899
      %v937 = vunpack.c.l.b16 %v900
      %v938 = vunpack.c.l.b16 %v901
      %v939 = vunpack.c.l.b16 %v902
      %v940 = vunpack.c.l.b16 %v903
      %v941 = vunpack.c.l.b16 %v904
      %v942 = vunpack.c.l.b16 %v905
      %v943 = vunpack.c.l.b16 %v906
      %v944 = vunpack.c.l.b16 %v907
      %v945 = vunpack.c.l.b16 %v908
      %v946 = vpack.c.b16 %v931, %v930
      %v947 = vpack.c.b16 %v933, %v932
      %v948 = vpack.c.b16 %v935, %v934
      %v949 = vpack.c.b16 %v937, %v936
      %v950 = vpack.c.b16 %v939, %v938
      %v951 = vpack.c.b16 %v941, %v940
      %v952 = vpack.c.b16 %v943, %v942
      %v953 = vpack.c.b16 %v945, %v944
      %962 = vmatpush.bf16.msra.mxu0 %v953
      %963 = vmatpush.bf16.msra.mxu0 %v952
      %964 = vmatpush.bf16.msra.mxu0 %v951
      %965 = vmatpush.bf16.msra.mxu0 %v950
      %966 = vmatpush.bf16.msra.mxu0 %v949
      %967 = vmatpush.bf16.msra.mxu0 %v948
      %968 = vmatpush.bf16.msra.mxu0 %v947
      %969 = vmatpush.bf16.msra.mxu0 %v946
      %970 = vmatmul.bf16.gmra.mxu0 %v886
      %v971 = vpop.f32.mrf.mxu0
      %v972 = vadd.f32 %v912, %v971
      %v973 = vpop.f32.mrf.mxu0
      %v974 = vadd.f32 %v912, %v973
      %975 = vmatmul.bf16.gmra.mxu0 %v887
      %v976 = vpop.f32.mrf.mxu0
      %v977 = vadd.f32 %v912, %v976
      %v978 = vpop.f32.mrf.mxu0
      %v979 = vadd.f32 %v912, %v978
      %980 = vmatmul.bf16.gmra.mxu0 %v888
      %v981 = vpop.f32.mrf.mxu0
      %v982 = vadd.f32 %v912, %v981
      %v983 = vpop.f32.mrf.mxu0
      %v984 = vadd.f32 %v912, %v983
      %985 = vmatmul.bf16.gmra.mxu0 %v889
      %v986 = vpop.f32.mrf.mxu0
      %v987 = vadd.f32 %v912, %v986
      %v988 = vpop.f32.mrf.mxu0
      %v989 = vadd.f32 %v912, %v988
      %990 = vmatmul.bf16.gmra.mxu0 %v890
      %v991 = vpop.f32.mrf.mxu0
      %v992 = vadd.f32 %v912, %v991
      %v993 = vpop.f32.mrf.mxu0
      %v994 = vadd.f32 %v912, %v993
      %995 = vmatmul.bf16.gmra.mxu0 %v891
      %v996 = vpop.f32.mrf.mxu0
      %v997 = vadd.f32 %v912, %v996
      %v998 = vpop.f32.mrf.mxu0
      %999 = vdwg.mxu0
      %v1000 = vtanh.pop %v972
      %v1001 = vtanh.pop %v974
      %v1002 = vtanh.pop %v977
      %v1003 = vtanh.pop %v979
      %v1004 = vtanh.pop %v982
      %v1005 = vtanh.pop %v984
      %v1006 = vtanh.pop %v987
      %v1007 = vtanh.pop %v989
      %v1008 = vtanh.pop %v992
      %v1009 = vtanh.pop %v994
      %v1010 = vtanh.pop %v997
      %v1011 = vpack.c.bf16 %v1001, %v1000
      %v1012 = vpack.c.bf16 %v1003, %v1002
      %v1013 = vpack.c.bf16 %v1005, %v1004
      %v1014 = vpack.c.bf16 %v1007, %v1006
      %v1015 = vpack.c.bf16 %v1009, %v1008
      %v1016 = vpack.c.bf16 %v1010, %v1010
      %s1017 = scalar_lea.vmem %s3, 320
      %v1018 = vld [vmem:[%s1017] sm:$0xf]
      %v1019 = vld [vmem:[%s1017 + $0x4] sm:$0xf]
      %v1020 = vld [vmem:[%s1017 + $0x8] sm:$0xf]
      %v1021 = vld [vmem:[%s1017 + $0xc] sm:$0xf]
      %v1022 = vld [vmem:[%s1017 + $0x10] sm:$0xf]
      %v1023 = vld [vmem:[%s1017 + $0x14] sm:$0xf]
      %v1024 = vld [vmem:[%s1017 + $0x18] sm:$0xf]
      %v1025 = vld [vmem:[%s1017 + $0x1c] sm:$0xf]
      %v1026 = vld [vmem:[%s1017 + $0x20] sm:$0xf]
      %v1027 = vld [vmem:[%s1017 + $0x24] sm:$0xf]
      %v1028 = vld [vmem:[%s1017 + $0x28] sm:$0xf]
      %v1029 = vld [vmem:[%s1017 + $0x2c] sm:$0xf]
      %v1030 = vld [vmem:[%s1017 + $0x30] sm:$0xf]
      %v1031 = vld [vmem:[%s1017 + $0x34] sm:$0xf]
      %v1032 = vld [vmem:[%s1017 + $0x38] sm:$0xf]
      %v1033 = vld [vmem:[%s1017 + $0x3c] sm:$0xf]
      %s1034 = scalar_lea.vmem %s4, 5
      %v1035 = vld [vmem:[%s1034] sm:$0x1]
      %v1037 = vperm.slane %v1035, 0
      %v1055 = vunpack.c.l.b16 %v1018
      %v1056 = vunpack.c.l.b16 %v1019
      %v1057 = vunpack.c.l.b16 %v1020
      %v1058 = vunpack.c.l.b16 %v1021
      %v1059 = vunpack.c.l.b16 %v1022
      %v1060 = vunpack.c.l.b16 %v1023
      %v1061 = vunpack.c.l.b16 %v1024
      %v1062 = vunpack.c.l.b16 %v1025
      %v1063 = vunpack.c.l.b16 %v1026
      %v1064 = vunpack.c.l.b16 %v1027
      %v1065 = vunpack.c.l.b16 %v1028
      %v1066 = vunpack.c.l.b16 %v1029
      %v1067 = vunpack.c.l.b16 %v1030
      %v1068 = vunpack.c.l.b16 %v1031
      %v1069 = vunpack.c.l.b16 %v1032
      %v1070 = vunpack.c.l.b16 %v1033
      %v1071 = vpack.c.b16 %v1056, %v1055
      %v1072 = vpack.c.b16 %v1058, %v1057
      %v1073 = vpack.c.b16 %v1060, %v1059
      %v1074 = vpack.c.b16 %v1062, %v1061
      %v1075 = vpack.c.b16 %v1064, %v1063
      %v1076 = vpack.c.b16 %v1066, %v1065
      %v1077 = vpack.c.b16 %v1068, %v1067
      %v1078 = vpack.c.b16 %v1070, %v1069
      %1087 = vmatpush.bf16.msra.mxu0 %v1078
      %1088 = vmatpush.bf16.msra.mxu0 %v1077
      %1089 = vmatpush.bf16.msra.mxu0 %v1076
      %1090 = vmatpush.bf16.msra.mxu0 %v1075
      %1091 = vmatpush.bf16.msra.mxu0 %v1074
      %1092 = vmatpush.bf16.msra.mxu0 %v1073
      %1093 = vmatpush.bf16.msra.mxu0 %v1072
      %1094 = vmatpush.bf16.msra.mxu0 %v1071
      %1095 = vmatmul.bf16.gmra.mxu0 %v1011
      %v1096 = vpop.f32.mrf.mxu0
      %v1097 = vadd.f32 %v1037, %v1096
      %v1098 = vpop.f32.mrf.mxu0
      %v1099 = vadd.f32 %v1037, %v1098
      %1100 = vmatmul.bf16.gmra.mxu0 %v1012
      %v1101 = vpop.f32.mrf.mxu0
      %v1102 = vadd.f32 %v1037, %v1101
      %v1103 = vpop.f32.mrf.mxu0
      %v1104 = vadd.f32 %v1037, %v1103
      %1105 = vmatmul.bf16.gmra.mxu0 %v1013
      %v1106 = vpop.f32.mrf.mxu0
      %v1107 = vadd.f32 %v1037, %v1106
      %v1108 = vpop.f32.mrf.mxu0
      %v1109 = vadd.f32 %v1037, %v1108
      %1110 = vmatmul.bf16.gmra.mxu0 %v1014
      %v1111 = vpop.f32.mrf.mxu0
      %v1112 = vadd.f32 %v1037, %v1111
      %v1113 = vpop.f32.mrf.mxu0
      %v1114 = vadd.f32 %v1037, %v1113
      %1115 = vmatmul.bf16.gmra.mxu0 %v1015
      %v1116 = vpop.f32.mrf.mxu0
      %v1117 = vadd.f32 %v1037, %v1116
      %v1118 = vpop.f32.mrf.mxu0
      %v1119 = vadd.f32 %v1037, %v1118
      %1120 = vmatmul.bf16.gmra.mxu0 %v1016
      %v1121 = vpop.f32.mrf.mxu0
      %v1122 = vadd.f32 %v1037, %v1121
      %v1123 = vpop.f32.mrf.mxu0
      %1124 = vdwg.mxu0
      %v1125 = vtanh.pop %v1097
      %v1126 = vtanh.pop %v1099
      %v1127 = vtanh.pop %v1102
      %v1128 = vtanh.pop %v1104
      %v1129 = vtanh.pop %v1107
      %v1130 = vtanh.pop %v1109
      %v1131 = vtanh.pop %v1112
      %v1132 = vtanh.pop %v1114
      %v1133 = vtanh.pop %v1117
      %v1134 = vtanh.pop %v1119
      %v1135 = vtanh.pop %v1122
      %v1136 = vpack.c.bf16 %v1126, %v1125
      %v1137 = vpack.c.bf16 %v1128, %v1127
      %v1138 = vpack.c.bf16 %v1130, %v1129
      %v1139 = vpack.c.bf16 %v1132, %v1131
      %v1140 = vpack.c.bf16 %v1134, %v1133
      %v1141 = vpack.c.bf16 %v1135, %v1135
      %s1142 = scalar_lea.vmem %s3, 384
      %v1143 = vld [vmem:[%s1142] sm:$0xf]
      %v1144 = vld [vmem:[%s1142 + $0x4] sm:$0xf]
      %v1145 = vld [vmem:[%s1142 + $0x8] sm:$0xf]
      %v1146 = vld [vmem:[%s1142 + $0xc] sm:$0xf]
      %v1147 = vld [vmem:[%s1142 + $0x10] sm:$0xf]
      %v1148 = vld [vmem:[%s1142 + $0x14] sm:$0xf]
      %v1149 = vld [vmem:[%s1142 + $0x18] sm:$0xf]
      %v1150 = vld [vmem:[%s1142 + $0x1c] sm:$0xf]
      %v1151 = vld [vmem:[%s1142 + $0x20] sm:$0xf]
      %v1152 = vld [vmem:[%s1142 + $0x24] sm:$0xf]
      %v1153 = vld [vmem:[%s1142 + $0x28] sm:$0xf]
      %v1154 = vld [vmem:[%s1142 + $0x2c] sm:$0xf]
      %v1155 = vld [vmem:[%s1142 + $0x30] sm:$0xf]
      %v1156 = vld [vmem:[%s1142 + $0x34] sm:$0xf]
      %v1157 = vld [vmem:[%s1142 + $0x38] sm:$0xf]
      %v1158 = vld [vmem:[%s1142 + $0x3c] sm:$0xf]
      %s1159 = scalar_lea.vmem %s4, 6
      %v1160 = vld [vmem:[%s1159] sm:$0x1]
      %v1162 = vperm.slane %v1160, 0
      %v1180 = vunpack.c.l.b16 %v1143
      %v1181 = vunpack.c.l.b16 %v1144
      %v1182 = vunpack.c.l.b16 %v1145
      %v1183 = vunpack.c.l.b16 %v1146
      %v1184 = vunpack.c.l.b16 %v1147
      %v1185 = vunpack.c.l.b16 %v1148
      %v1186 = vunpack.c.l.b16 %v1149
      %v1187 = vunpack.c.l.b16 %v1150
      %v1188 = vunpack.c.l.b16 %v1151
      %v1189 = vunpack.c.l.b16 %v1152
      %v1190 = vunpack.c.l.b16 %v1153
      %v1191 = vunpack.c.l.b16 %v1154
      %v1192 = vunpack.c.l.b16 %v1155
      %v1193 = vunpack.c.l.b16 %v1156
      %v1194 = vunpack.c.l.b16 %v1157
      %v1195 = vunpack.c.l.b16 %v1158
      %v1196 = vpack.c.b16 %v1181, %v1180
      %v1197 = vpack.c.b16 %v1183, %v1182
      %v1198 = vpack.c.b16 %v1185, %v1184
      %v1199 = vpack.c.b16 %v1187, %v1186
      %v1200 = vpack.c.b16 %v1189, %v1188
      %v1201 = vpack.c.b16 %v1191, %v1190
      %v1202 = vpack.c.b16 %v1193, %v1192
      %v1203 = vpack.c.b16 %v1195, %v1194
      %1212 = vmatpush.bf16.msra.mxu0 %v1203
      %1213 = vmatpush.bf16.msra.mxu0 %v1202
      %1214 = vmatpush.bf16.msra.mxu0 %v1201
      %1215 = vmatpush.bf16.msra.mxu0 %v1200
      %1216 = vmatpush.bf16.msra.mxu0 %v1199
      %1217 = vmatpush.bf16.msra.mxu0 %v1198
      %1218 = vmatpush.bf16.msra.mxu0 %v1197
      %1219 = vmatpush.bf16.msra.mxu0 %v1196
      %1220 = vmatmul.bf16.gmra.mxu0 %v1136
      %v1221 = vpop.f32.mrf.mxu0
      %v1222 = vadd.f32 %v1162, %v1221
      %v1223 = vpop.f32.mrf.mxu0
      %v1224 = vadd.f32 %v1162, %v1223
      %1225 = vmatmul.bf16.gmra.mxu0 %v1137
      %v1226 = vpop.f32.mrf.mxu0
      %v1227 = vadd.f32 %v1162, %v1226
      %v1228 = vpop.f32.mrf.mxu0
      %v1229 = vadd.f32 %v1162, %v1228
      %1230 = vmatmul.bf16.gmra.mxu0 %v1138
      %v1231 = vpop.f32.mrf.mxu0
      %v1232 = vadd.f32 %v1162, %v1231
      %v1233 = vpop.f32.mrf.mxu0
      %v1234 = vadd.f32 %v1162, %v1233
      %1235 = vmatmul.bf16.gmra.mxu0 %v1139
      %v1236 = vpop.f32.mrf.mxu0
      %v1237 = vadd.f32 %v1162, %v1236
      %v1238 = vpop.f32.mrf.mxu0
      %v1239 = vadd.f32 %v1162, %v1238
      %1240 = vmatmul.bf16.gmra.mxu0 %v1140
      %v1241 = vpop.f32.mrf.mxu0
      %v1242 = vadd.f32 %v1162, %v1241
      %v1243 = vpop.f32.mrf.mxu0
      %v1244 = vadd.f32 %v1162, %v1243
      %1245 = vmatmul.bf16.gmra.mxu0 %v1141
      %v1246 = vpop.f32.mrf.mxu0
      %v1247 = vadd.f32 %v1162, %v1246
      %v1248 = vpop.f32.mrf.mxu0
      %1249 = vdwg.mxu0
      %v1250 = vtanh.pop %v1222
      %v1251 = vtanh.pop %v1224
      %v1252 = vtanh.pop %v1227
      %v1253 = vtanh.pop %v1229
      %v1254 = vtanh.pop %v1232
      %v1255 = vtanh.pop %v1234
      %v1256 = vtanh.pop %v1237
      %v1257 = vtanh.pop %v1239
      %v1258 = vtanh.pop %v1242
      %v1259 = vtanh.pop %v1244
      %v1260 = vtanh.pop %v1247
      %v1261 = vpack.c.bf16 %v1251, %v1250
      %v1262 = vpack.c.bf16 %v1253, %v1252
      %v1263 = vpack.c.bf16 %v1255, %v1254
      %v1264 = vpack.c.bf16 %v1257, %v1256
      %v1265 = vpack.c.bf16 %v1259, %v1258
      %v1266 = vpack.c.bf16 %v1260, %v1260
      %s1267 = scalar_lea.vmem %s3, 448
      %v1268 = vld [vmem:[%s1267] sm:$0xf]
      %v1269 = vld [vmem:[%s1267 + $0x4] sm:$0xf]
      %v1270 = vld [vmem:[%s1267 + $0x8] sm:$0xf]
      %v1271 = vld [vmem:[%s1267 + $0xc] sm:$0xf]
      %v1272 = vld [vmem:[%s1267 + $0x10] sm:$0xf]
      %v1273 = vld [vmem:[%s1267 + $0x14] sm:$0xf]
      %v1274 = vld [vmem:[%s1267 + $0x18] sm:$0xf]
      %v1275 = vld [vmem:[%s1267 + $0x1c] sm:$0xf]
      %v1276 = vld [vmem:[%s1267 + $0x20] sm:$0xf]
      %v1277 = vld [vmem:[%s1267 + $0x24] sm:$0xf]
      %v1278 = vld [vmem:[%s1267 + $0x28] sm:$0xf]
      %v1279 = vld [vmem:[%s1267 + $0x2c] sm:$0xf]
      %v1280 = vld [vmem:[%s1267 + $0x30] sm:$0xf]
      %v1281 = vld [vmem:[%s1267 + $0x34] sm:$0xf]
      %v1282 = vld [vmem:[%s1267 + $0x38] sm:$0xf]
      %v1283 = vld [vmem:[%s1267 + $0x3c] sm:$0xf]
      %s1284 = scalar_lea.vmem %s4, 7
      %v1285 = vld [vmem:[%s1284] sm:$0x1]
      %v1287 = vperm.slane %v1285, 0
      %v1305 = vunpack.c.l.b16 %v1268
      %v1306 = vunpack.c.l.b16 %v1269
      %v1307 = vunpack.c.l.b16 %v1270
      %v1308 = vunpack.c.l.b16 %v1271
      %v1309 = vunpack.c.l.b16 %v1272
      %v1310 = vunpack.c.l.b16 %v1273
      %v1311 = vunpack.c.l.b16 %v1274
      %v1312 = vunpack.c.l.b16 %v1275
      %v1313 = vunpack.c.l.b16 %v1276
      %v1314 = vunpack.c.l.b16 %v1277
      %v1315 = vunpack.c.l.b16 %v1278
      %v1316 = vunpack.c.l.b16 %v1279
      %v1317 = vunpack.c.l.b16 %v1280
      %v1318 = vunpack.c.l.b16 %v1281
      %v1319 = vunpack.c.l.b16 %v1282
      %v1320 = vunpack.c.l.b16 %v1283
      %v1321 = vpack.c.b16 %v1306, %v1305
      %v1322 = vpack.c.b16 %v1308, %v1307
      %v1323 = vpack.c.b16 %v1310, %v1309
      %v1324 = vpack.c.b16 %v1312, %v1311
      %v1325 = vpack.c.b16 %v1314, %v1313
      %v1326 = vpack.c.b16 %v1316, %v1315
      %v1327 = vpack.c.b16 %v1318, %v1317
      %v1328 = vpack.c.b16 %v1320, %v1319
      %1337 = vmatpush.bf16.msra.mxu0 %v1328
      %1338 = vmatpush.bf16.msra.mxu0 %v1327
      %1339 = vmatpush.bf16.msra.mxu0 %v1326
      %1340 = vmatpush.bf16.msra.mxu0 %v1325
      %1341 = vmatpush.bf16.msra.mxu0 %v1324
      %1342 = vmatpush.bf16.msra.mxu0 %v1323
      %1343 = vmatpush.bf16.msra.mxu0 %v1322
      %1344 = vmatpush.bf16.msra.mxu0 %v1321
      %1345 = vmatmul.bf16.gmra.mxu0 %v1261
      %v1346 = vpop.f32.mrf.mxu0
      %v1347 = vadd.f32 %v1287, %v1346
      %v1348 = vpop.f32.mrf.mxu0
      %v1349 = vadd.f32 %v1287, %v1348
      %1350 = vmatmul.bf16.gmra.mxu0 %v1262
      %v1351 = vpop.f32.mrf.mxu0
      %v1352 = vadd.f32 %v1287, %v1351
      %v1353 = vpop.f32.mrf.mxu0
      %v1354 = vadd.f32 %v1287, %v1353
      %1355 = vmatmul.bf16.gmra.mxu0 %v1263
      %v1356 = vpop.f32.mrf.mxu0
      %v1357 = vadd.f32 %v1287, %v1356
      %v1358 = vpop.f32.mrf.mxu0
      %v1359 = vadd.f32 %v1287, %v1358
      %1360 = vmatmul.bf16.gmra.mxu0 %v1264
      %v1361 = vpop.f32.mrf.mxu0
      %v1362 = vadd.f32 %v1287, %v1361
      %v1363 = vpop.f32.mrf.mxu0
      %v1364 = vadd.f32 %v1287, %v1363
      %1365 = vmatmul.bf16.gmra.mxu0 %v1265
      %v1366 = vpop.f32.mrf.mxu0
      %v1367 = vadd.f32 %v1287, %v1366
      %v1368 = vpop.f32.mrf.mxu0
      %v1369 = vadd.f32 %v1287, %v1368
      %1370 = vmatmul.bf16.gmra.mxu0 %v1266
      %v1371 = vpop.f32.mrf.mxu0
      %v1372 = vadd.f32 %v1287, %v1371
      %v1373 = vpop.f32.mrf.mxu0
      %1374 = vdwg.mxu0
      %v1375 = vtanh.pop %v1347
      %v1376 = vtanh.pop %v1349
      %v1377 = vtanh.pop %v1352
      %v1378 = vtanh.pop %v1354
      %v1379 = vtanh.pop %v1357
      %v1380 = vtanh.pop %v1359
      %v1381 = vtanh.pop %v1362
      %v1382 = vtanh.pop %v1364
      %v1383 = vtanh.pop %v1367
      %v1384 = vtanh.pop %v1369
      %v1385 = vtanh.pop %v1372
      %v1386 = vpack.c.bf16 %v1376, %v1375
      %v1387 = vpack.c.bf16 %v1378, %v1377
      %v1388 = vpack.c.bf16 %v1380, %v1379
      %v1389 = vpack.c.bf16 %v1382, %v1381
      %v1390 = vpack.c.bf16 %v1384, %v1383
      %v1391 = vpack.c.bf16 %v1385, %v1385
      %v1392 = vld [vmem:[%s5] sm:$0xf]
      %v1393 = vld [vmem:[%s5 + $0x4] sm:$0xf]
      %v1394 = vld [vmem:[%s5 + $0x8] sm:$0xf]
      %v1395 = vld [vmem:[%s5 + $0xc] sm:$0xf]
      %v1396 = vld [vmem:[%s5 + $0x10] sm:$0xf]
      %v1397 = vld [vmem:[%s5 + $0x14] sm:$0xf]
      %v1398 = vld [vmem:[%s5 + $0x18] sm:$0xf]
      %v1399 = vld [vmem:[%s5 + $0x1c] sm:$0xf]
      %v1400 = vld [vmem:[%s5 + $0x20] sm:$0xf]
      %v1401 = vld [vmem:[%s5 + $0x24] sm:$0xf]
      %v1402 = vld [vmem:[%s5 + $0x28] sm:$0xf]
      %v1403 = vld [vmem:[%s5 + $0x2c] sm:$0xf]
      %v1404 = vld [vmem:[%s5 + $0x30] sm:$0xf]
      %v1405 = vld [vmem:[%s5 + $0x34] sm:$0xf]
      %v1406 = vld [vmem:[%s5 + $0x38] sm:$0xf]
      %v1407 = vld [vmem:[%s5 + $0x3c] sm:$0xf]
      %v1408 = vld [vmem:[%s6] sm:$0x1]
      %v1410 = vperm.slane %v1408, 0
      %v1428 = vunpack.c.l.b16 %v1392
      %v1429 = vunpack.c.l.b16 %v1393
      %v1430 = vunpack.c.l.b16 %v1394
      %v1431 = vunpack.c.l.b16 %v1395
      %v1432 = vunpack.c.l.b16 %v1396
      %v1433 = vunpack.c.l.b16 %v1397
      %v1434 = vunpack.c.l.b16 %v1398
      %v1435 = vunpack.c.l.b16 %v1399
      %v1436 = vunpack.c.l.b16 %v1400
      %v1437 = vunpack.c.l.b16 %v1401
      %v1438 = vunpack.c.l.b16 %v1402
      %v1439 = vunpack.c.l.b16 %v1403
      %v1440 = vunpack.c.l.b16 %v1404
      %v1441 = vunpack.c.l.b16 %v1405
      %v1442 = vunpack.c.l.b16 %v1406
      %v1443 = vunpack.c.l.b16 %v1407
      %v1444 = vpack.c.b16 %v1429, %v1428
      %v1445 = vpack.c.b16 %v1431, %v1430
      %v1446 = vpack.c.b16 %v1433, %v1432
      %v1447 = vpack.c.b16 %v1435, %v1434
      %v1448 = vpack.c.b16 %v1437, %v1436
      %v1449 = vpack.c.b16 %v1439, %v1438
      %v1450 = vpack.c.b16 %v1441, %v1440
      %v1451 = vpack.c.b16 %v1443, %v1442
      %1460 = vmatpush.bf16.msra.mxu0 %v1451
      %1461 = vmatpush.bf16.msra.mxu0 %v1450
      %1462 = vmatpush.bf16.msra.mxu0 %v1449
      %1463 = vmatpush.bf16.msra.mxu0 %v1448
      %1464 = vmatpush.bf16.msra.mxu0 %v1447
      %1465 = vmatpush.bf16.msra.mxu0 %v1446
      %1466 = vmatpush.bf16.msra.mxu0 %v1445
      %1467 = vmatpush.bf16.msra.mxu0 %v1444
      %1468 = vmatmul.bf16.gmra.mxu0 %v1386
      %v1469 = vpop.f32.mrf.mxu0
      %v1470 = vadd.f32 %v1410, %v1469
      %v1471 = vpop.f32.mrf.mxu0
      %v1472 = vadd.f32 %v1410, %v1471
      %1473 = vmatmul.bf16.gmra.mxu0 %v1387
      %v1474 = vpop.f32.mrf.mxu0
      %v1475 = vadd.f32 %v1410, %v1474
      %v1476 = vpop.f32.mrf.mxu0
      %v1477 = vadd.f32 %v1410, %v1476
      %1478 = vmatmul.bf16.gmra.mxu0 %v1388
      %v1479 = vpop.f32.mrf.mxu0
      %v1480 = vadd.f32 %v1410, %v1479
      %v1481 = vpop.f32.mrf.mxu0
      %v1482 = vadd.f32 %v1410, %v1481
      %1483 = vmatmul.bf16.gmra.mxu0 %v1389
      %v1484 = vpop.f32.mrf.mxu0
      %v1485 = vadd.f32 %v1410, %v1484
      %v1486 = vpop.f32.mrf.mxu0
      %v1487 = vadd.f32 %v1410, %v1486
      %1488 = vmatmul.bf16.gmra.mxu0 %v1390
      %v1489 = vpop.f32.mrf.mxu0
      %v1490 = vadd.f32 %v1410, %v1489
      %v1491 = vpop.f32.mrf.mxu0
      %v1492 = vadd.f32 %v1410, %v1491
      %1493 = vmatmul.bf16.gmra.mxu0 %v1391
      %v1494 = vpop.f32.mrf.mxu0
      %v1495 = vadd.f32 %v1410, %v1494
      %v1496 = vpop.f32.mrf.mxu0
      %1497 = vdwg.mxu0
      %vm1498 = vcmask 97280
      %1499 = vst.msk [vmem:[%s280] sm:$0xff] %vm1498, %v1470
      %1500 = vst.msk [vmem:[%s280 + $0x8] sm:$0xff] %vm1498, %v1472
      %1501 = vst.msk [vmem:[%s280 + $0x10] sm:$0xff] %vm1498, %v1475
      %1502 = vst.msk [vmem:[%s280 + $0x18] sm:$0xff] %vm1498, %v1477
      %1503 = vst.msk [vmem:[%s280 + $0x20] sm:$0xff] %vm1498, %v1480
      %1504 = vst.msk [vmem:[%s280 + $0x28] sm:$0xff] %vm1498, %v1482
      %1505 = vst.msk [vmem:[%s280 + $0x30] sm:$0xff] %vm1498, %v1485
      %1506 = vst.msk [vmem:[%s280 + $0x38] sm:$0xff] %vm1498, %v1487
      %1507 = vst.msk [vmem:[%s280 + $0x40] sm:$0xff] %vm1498, %v1490
      %1508 = vst.msk [vmem:[%s280 + $0x48] sm:$0xff] %vm1498, %v1492
      %1509 = vst.msk [vmem:[%s280 + $0x50] sm:$0xff] %vm1498, %v1495
      %s1510 = smul.u32 11, %s18
      %p1511 = scmp.lt.s32.totalorder %s1510, 21
      %s1512 = scalar_select %p1511, %s1510, 21
      %s1513 = smul.addr %s1512, 8
      %s1514 = scalar_lea.vmem %s7, %s1513
      // Predicated region
      $region49: #{model_forward.1} parent=47 // pred_check
        %p1515 = pneg %p188
      $region50: #{model_forward.1} parent=47 // pred_check_branch
        %1517 = sbr.rel (%p1515) target = $region52
      $region51: #{model_forward.1} parent=47 // pred_region
        %s1518 = smul.u32 11, %s18
      $region52: #{model_forward.1} parent=47 // pred_fallthru
        _
    $region48: #{model_forward.1} parent=5 // pred_fallthru
      _
    %p1519 = scmp.le.s32.totalorder 2, %s13
    // Predicated region
    $region53: #{model_forward.1} parent=5 // pred_check
      %p1520 = pneg %p1519
    $region54: #{model_forward.1} parent=5 // pred_check_branch
      %1522 = sbr.rel (%p1520) target = $region56
    $region55: #{model_forward.1} parent=5 // pred_region
      %s1523 = ssub.s32 %s13, 2
      // Predicated region
      $region57: #{model_forward.1} parent=55 // pred_check
        %p1524 = pneg %p194
      $region58: #{model_forward.1} parent=55 // pred_check_branch
        %1526 = sbr.rel (%p1524) target = $region60
      $region59: #{model_forward.1} parent=55 // pred_region
        %s1527 = smul.u32 11, %s19
        %p1528 = scmp.lt.s32.totalorder %s1527, 21
        %s1529 = scalar_select %p1528, %s1527, 21
        %s1530 = smul.addr %s1529, 8
        %s1531 = scalar_lea.vmem %s7, %s1530
      $region60: #{model_forward.1} parent=55 // pred_fallthru
        _
    $region56: #{model_forward.1} parent=5 // pred_fallthru
      _
  $region6: #{model_forward.1} parent=0 // loop_footer
    %s17 = sadd.s32 1, %s13
  $region7: #{model_forward.1} parent=0 // loop_footer_branch
    %12 = sbr.rel target = $region3
  $region8: #{model_forward.1} parent=0 // loop_exit
    _

</llo_original>
